<compile_context>
chip_gen: v7x
topology: tpu7x:2x2x1
jax: 0.10.0
libtpu: 0.0.40
codegen_flags: <defaults>
</compile_context>

<pallas_src>
import functools

import jax
import jax.numpy as jnp
from jax import lax
from jax.experimental import pallas as pl
from jax.experimental.pallas import tpu as pltpu

HP = 128   # per-gate lane-aligned slab width (hidden 64 padded to 128)
OP = 128   # padded classifier output width (10 padded to 128)


def _gru_fc_kernel(x_ref, wih_ref, whh_ref, bgi_ref, bhn_ref, wfc_ref,
                   bfc_ref, out_ref, *, T, B):
    # ---- prologue: input projection for every timestep in ONE MXU matmul ----
    # x_ref: (T*B, I); wih_ref: (I, 3*HP);
    # bgi_ref: [b_ih_r + b_hh_r, b_ih_z + b_hh_z, b_ih_n] padded to 3*HP lanes.
    gi_all = (jnp.dot(x_ref[...], wih_ref[...],
                      preferred_element_type=jnp.float32) + bgi_ref[...])

    # hoisted bias broadcast for the n-gate hidden term (must stay inside r*()).
    b_hn = jnp.broadcast_to(bhn_ref[...], (B, HP))

    h = jnp.zeros((B, HP), jnp.float32)    # padded lanes [H:HP] stay exactly 0
    for t in range(T):                     # T is static -> fully unrolled
        gi = gi_all[t * B:(t + 1) * B, :]                        # (B, 3*HP)
        # only the hidden projection remains on the serial recurrence.
        gh = jnp.dot(h, whh_ref[...],
                     preferred_element_type=jnp.float32)         # (B, 3*HP)
        # gate slabs are exactly 128-lane aligned (whole-vreg views).
        r = jax.nn.sigmoid(gi[:, 0 * HP:1 * HP] + gh[:, 0 * HP:1 * HP])
        z = jax.nn.sigmoid(gi[:, 1 * HP:2 * HP] + gh[:, 1 * HP:2 * HP])
        n = jnp.tanh(gi[:, 2 * HP:3 * HP] + r * (gh[:, 2 * HP:3 * HP] + b_hn))
        h = (1.0 - z) * n + z * h

    # ---- classifier head on the last hidden state (lane-dense 128 store) ----
    out_ref[...] = (jnp.dot(h, wfc_ref[...],
                            preferred_element_type=jnp.float32)
                    + bfc_ref[...]).astype(out_ref.dtype)


def rnn_classifier_forward(x, packed_params, output_size=10):
    """x: (B, T, I) float32 (PyTorch batch_first). Returns (B, output_size)."""
    B, T, I = x.shape
    wih_p, whh_p, b_gi, b_hn, wfc_p, bfc_p = packed_params

    # time-major + flattened so the kernel prologue is one (T*B, I) matmul.
    x2d = jnp.transpose(x, (1, 0, 2)).reshape(T * B, I)

    kernel = functools.partial(_gru_fc_kernel, T=T, B=B)
    out_p = pl.pallas_call(
        kernel,
        out_shape=jax.ShapeDtypeStruct((B, OP), jnp.float32),
        # No grid / default BlockSpecs: every operand is placed whole in VMEM
        # for a single invocation (total footprint ~100 KB, fits all of
        # v5e/v6e/v7x scoped VMEM with huge margin).
    )(x2d, wih_p, whh_p, b_gi, b_hn, wfc_p, bfc_p)
    return out_p[:, :output_size]


def init_params(key, input_size=26, hidden_size=64, output_size=10):
    """PyTorch-layout params: nn.GRU weight_ih (3H,I), weight_hh (3H,H),
    biases (3H,), nn.Linear weight (O,H), bias (O,). U(-1/sqrt(H), 1/sqrt(H))."""
    ks = jax.random.split(key, 6)
    kH = 1.0 / float(jnp.sqrt(float(hidden_size)))
    u = lambda k, shape: jax.random.uniform(k, shape, minval=-kH, maxval=kH,
                                            dtype=jnp.float32)
    w_ih = u(ks[0], (3 * hidden_size, input_size))
    w_hh = u(ks[1], (3 * hidden_size, hidden_size))
    b_ih = u(ks[2], (3 * hidden_size,))
    b_hh = u(ks[3], (3 * hidden_size,))
    w_fc = u(ks[4], (output_size, hidden_size))
    b_fc = u(ks[5], (output_size,))
    return (w_ih, w_hh, b_ih, b_hh, w_fc, b_fc)


def pack_params(raw_params, hidden_size=64, output_size=10):
    """Repack PyTorch-layout params into MXU/lane-friendly form:
       - right-multiply (transposed) weights,
       - each gate (order r, z, n) on its own 128-lane slab (H padded to 128,
         zero rows/cols so padded hidden lanes never leak into real ones),
       - b_ih + b_hh pre-combined for the r/z gates (b_hh_n kept separate),
       - FC weight/bias padded to a 128-wide output slab."""
    w_ih, w_hh, b_ih, b_hh, w_fc, b_fc = raw_params
    H, O = hidden_size, output_size
    I = w_ih.shape[1]

    wih_p = jnp.zeros((I, 3 * HP), jnp.float32)
    whh_p = jnp.zeros((HP, 3 * HP), jnp.float32)
    b_gi = jnp.zeros((1, 3 * HP), jnp.float32)
    for g in range(3):
        wih_p = wih_p.at[:, g * HP:g * HP + H].set(w_ih[g * H:(g + 1) * H, :].T)
        whh_p = whh_p.at[:H, g * HP:g * HP + H].set(w_hh[g * H:(g + 1) * H, :].T)
        bias = b_ih[g * H:(g + 1) * H]
        if g < 2:   # r, z: fold the hidden bias into the precomputed gi
            bias = bias + b_hh[g * H:(g + 1) * H]
        b_gi = b_gi.at[0, g * HP:g * HP + H].set(bias)
    b_hn = jnp.zeros((1, HP), jnp.float32).at[0, :H].set(b_hh[2 * H:])
    wfc_p = jnp.zeros((HP, OP), jnp.float32).at[:H, :O].set(w_fc.T)
    bfc_p = jnp.zeros((1, OP), jnp.float32).at[0, :O].set(b_fc)
    return (wih_p, whh_p, b_gi, b_hn, wfc_p, bfc_p)


def reference_forward(x, raw_params):
    """Pure-JAX GRU + Linear reference matching PyTorch nn.GRU / nn.Linear."""
    w_ih, w_hh, b_ih, b_hh, w_fc, b_fc = raw_params
    B = x.shape[0]
    H = w_hh.shape[1]

    def step(h, x_t):
        gi = x_t @ w_ih.T + b_ih
        gh = h @ w_hh.T + b_hh
        i_r, i_z, i_n = jnp.split(gi, 3, axis=-1)
        h_r, h_z, h_n = jnp.split(gh, 3, axis=-1)
        r = jax.nn.sigmoid(i_r + h_r)
        z = jax.nn.sigmoid(i_z + h_z)
        n = jnp.tanh(i_n + r * h_n)
        return (1.0 - z) * n + z * h, None

    h0 = jnp.zeros((B, H), jnp.float32)
    h_last, _ = lax.scan(step, h0, jnp.transpose(x, (1, 0, 2)))
    return h_last @ w_fc.T + b_fc


if __name__ == "__main__":
    key = jax.random.PRNGKey(0)
    k_param, k_x = jax.random.split(key)

    B, T, I, H, O = 2, 8, 26, 64, 10
    raw = init_params(k_param, input_size=I, hidden_size=H, output_size=O)
    packed = pack_params(raw, hidden_size=H, output_size=O)
    x = jax.random.normal(k_x, (B, T, I), dtype=jnp.float32)

    out = rnn_classifier_forward(x, packed, output_size=O)
    out = jax.block_until_ready(out)

    ref = reference_forward(x, raw)
    assert out.shape == (B, O)
    assert jnp.allclose(out, ref, atol=1e-5, rtol=1e-5), \
        float(jnp.max(jnp.abs(out - ref)))

    print("KERNEL_OK")
</pallas_src>

<mosaic_0001>
module attributes {stable_mosaic.version = 11 : i64} {
  func.func @_gru_fc_kernel(%arg0: memref<16x26xf32, #tpu.memory_space<vmem>>, %arg1: memref<26x384xf32, #tpu.memory_space<vmem>>, %arg2: memref<128x384xf32, #tpu.memory_space<vmem>>, %arg3: memref<1x384xf32, #tpu.memory_space<vmem>>, %arg4: memref<1x128xf32, #tpu.memory_space<vmem>>, %arg5: memref<128x128xf32, #tpu.memory_space<vmem>>, %arg6: memref<1x128xf32, #tpu.memory_space<vmem>>, %arg7: memref<2x128xf32, #tpu.memory_space<vmem>>) attributes {dimension_semantics = [], scalar_prefetch = 0 : i64, scratch_operands = 0 : i64, tpu.core_type = #tpu.core_type<tc>} {
    %c0 = arith.constant 0 : index
    %c0_0 = arith.constant 0 : index
    %0 = vector.load %arg0[%c0, %c0_0] : memref<16x26xf32, #tpu.memory_space<vmem>>, vector<16x26xf32>
    %c0_1 = arith.constant 0 : index
    %c0_2 = arith.constant 0 : index
    %1 = vector.load %arg1[%c0_1, %c0_2] : memref<26x384xf32, #tpu.memory_space<vmem>>, vector<26x384xf32>
    %cst = arith.constant dense<0.000000e+00> : vector<16x384xf32>
    %2 = tpu.matmul %0, %1, %cst {dimension_numbers = #tpu.dot_dimension_numbers<[1], [0], [0], [1], [0, 0, 1, 1], [], []>} : vector<16x26xf32>, vector<26x384xf32>, vector<16x384xf32> -> vector<16x384xf32>
    %c0_3 = arith.constant 0 : index
    %c0_4 = arith.constant 0 : index
    %3 = vector.load %arg3[%c0_3, %c0_4] : memref<1x384xf32, #tpu.memory_space<vmem>>, vector<1x384xf32>
    %4 = vector.broadcast %3 : vector<1x384xf32> to vector<16x384xf32>
    %5 = arith.addf %2, %4 : vector<16x384xf32>
    %c0_5 = arith.constant 0 : index
    %c0_6 = arith.constant 0 : index
    %6 = vector.load %arg4[%c0_5, %c0_6] : memref<1x128xf32, #tpu.memory_space<vmem>>, vector<1x128xf32>
    %7 = vector.shape_cast %6 : vector<1x128xf32> to vector<1x128xf32>
    %8 = vector.broadcast %7 : vector<1x128xf32> to vector<2x128xf32>
    %cst_7 = arith.constant 0.000000e+00 : f32
    %9 = vector.broadcast %cst_7 : f32 to vector<2x128xf32>
    %10 = vector.extract_strided_slice %5 {offsets = [0, 0], sizes = [2, 384], strides = [1, 1]} : vector<16x384xf32> to vector<2x384xf32>
    %c0_8 = arith.constant 0 : index
    %c0_9 = arith.constant 0 : index
    %11 = vector.load %arg2[%c0_8, %c0_9] : memref<128x384xf32, #tpu.memory_space<vmem>>, vector<128x384xf32>
    %cst_10 = arith.constant dense<0.000000e+00> : vector<2x384xf32>
    %12 = tpu.matmul %9, %11, %cst_10 {dimension_numbers = #tpu.dot_dimension_numbers<[1], [0], [0], [1], [0, 0, 1, 1], [], []>} : vector<2x128xf32>, vector<128x384xf32>, vector<2x384xf32> -> vector<2x384xf32>
    %13 = vector.extract_strided_slice %10 {offsets = [0, 0], sizes = [2, 128], strides = [1, 1]} : vector<2x384xf32> to vector<2x128xf32>
    %14 = vector.extract_strided_slice %12 {offsets = [0, 0], sizes = [2, 128], strides = [1, 1]} : vector<2x384xf32> to vector<2x128xf32>
    %15 = arith.addf %13, %14 : vector<2x128xf32>
    %16 = arith.negf %15 : vector<2x128xf32>
    %17 = math.exp %16 : vector<2x128xf32>
    %cst_11 = arith.constant 1.000000e+00 : f32
    %18 = vector.broadcast %cst_11 : f32 to vector<2x128xf32>
    %19 = arith.addf %18, %17 : vector<2x128xf32>
    %20 = arith.divf %18, %19 : vector<2x128xf32>
    %21 = vector.extract_strided_slice %10 {offsets = [0, 128], sizes = [2, 128], strides = [1, 1]} : vector<2x384xf32> to vector<2x128xf32>
    %22 = vector.extract_strided_slice %12 {offsets = [0, 128], sizes = [2, 128], strides = [1, 1]} : vector<2x384xf32> to vector<2x128xf32>
    %23 = arith.addf %21, %22 : vector<2x128xf32>
    %24 = arith.negf %23 : vector<2x128xf32>
    %25 = math.exp %24 : vector<2x128xf32>
    %cst_12 = arith.constant 1.000000e+00 : f32
    %26 = vector.broadcast %cst_12 : f32 to vector<2x128xf32>
    %27 = arith.addf %26, %25 : vector<2x128xf32>
    %28 = arith.divf %26, %27 : vector<2x128xf32>
    %29 = vector.extract_strided_slice %10 {offsets = [0, 256], sizes = [2, 128], strides = [1, 1]} : vector<2x384xf32> to vector<2x128xf32>
    %30 = vector.extract_strided_slice %12 {offsets = [0, 256], sizes = [2, 128], strides = [1, 1]} : vector<2x384xf32> to vector<2x128xf32>
    %31 = arith.addf %30, %8 : vector<2x128xf32>
    %32 = arith.mulf %20, %31 : vector<2x128xf32>
    %33 = arith.addf %29, %32 : vector<2x128xf32>
    %34 = math.tanh %33 : vector<2x128xf32>
    %cst_13 = arith.constant 1.000000e+00 : f32
    %35 = vector.broadcast %cst_13 : f32 to vector<2x128xf32>
    %36 = arith.subf %35, %28 : vector<2x128xf32>
    %37 = arith.mulf %36, %34 : vector<2x128xf32>
    %38 = arith.mulf %28, %9 : vector<2x128xf32>
    %39 = arith.addf %37, %38 : vector<2x128xf32>
    %40 = vector.extract_strided_slice %5 {offsets = [2, 0], sizes = [2, 384], strides = [1, 1]} : vector<16x384xf32> to vector<2x384xf32>
    %c0_14 = arith.constant 0 : index
    %c0_15 = arith.constant 0 : index
    %41 = vector.load %arg2[%c0_14, %c0_15] : memref<128x384xf32, #tpu.memory_space<vmem>>, vector<128x384xf32>
    %cst_16 = arith.constant dense<0.000000e+00> : vector<2x384xf32>
    %42 = tpu.matmul %39, %41, %cst_16 {dimension_numbers = #tpu.dot_dimension_numbers<[1], [0], [0], [1], [0, 0, 1, 1], [], []>} : vector<2x128xf32>, vector<128x384xf32>, vector<2x384xf32> -> vector<2x384xf32>
    %43 = vector.extract_strided_slice %40 {offsets = [0, 0], sizes = [2, 128], strides = [1, 1]} : vector<2x384xf32> to vector<2x128xf32>
    %44 = vector.extract_strided_slice %42 {offsets = [0, 0], sizes = [2, 128], strides = [1, 1]} : vector<2x384xf32> to vector<2x128xf32>
    %45 = arith.addf %43, %44 : vector<2x128xf32>
    %46 = arith.negf %45 : vector<2x128xf32>
    %47 = math.exp %46 : vector<2x128xf32>
    %cst_17 = arith.constant 1.000000e+00 : f32
    %48 = vector.broadcast %cst_17 : f32 to vector<2x128xf32>
    %49 = arith.addf %48, %47 : vector<2x128xf32>
    %50 = arith.divf %48, %49 : vector<2x128xf32>
    %51 = vector.extract_strided_slice %40 {offsets = [0, 128], sizes = [2, 128], strides = [1, 1]} : vector<2x384xf32> to vector<2x128xf32>
    %52 = vector.extract_strided_slice %42 {offsets = [0, 128], sizes = [2, 128], strides = [1, 1]} : vector<2x384xf32> to vector<2x128xf32>
    %53 = arith.addf %51, %52 : vector<2x128xf32>
    %54 = arith.negf %53 : vector<2x128xf32>
    %55 = math.exp %54 : vector<2x128xf32>
    %cst_18 = arith.constant 1.000000e+00 : f32
    %56 = vector.broadcast %cst_18 : f32 to vector<2x128xf32>
    %57 = arith.addf %56, %55 : vector<2x128xf32>
    %58 = arith.divf %56, %57 : vector<2x128xf32>
    %59 = vector.extract_strided_slice %40 {offsets = [0, 256], sizes = [2, 128], strides = [1, 1]} : vector<2x384xf32> to vector<2x128xf32>
    %60 = vector.extract_strided_slice %42 {offsets = [0, 256], sizes = [2, 128], strides = [1, 1]} : vector<2x384xf32> to vector<2x128xf32>
    %61 = arith.addf %60, %8 : vector<2x128xf32>
    %62 = arith.mulf %50, %61 : vector<2x128xf32>
    %63 = arith.addf %59, %62 : vector<2x128xf32>
    %64 = math.tanh %63 : vector<2x128xf32>
    %cst_19 = arith.constant 1.000000e+00 : f32
    %65 = vector.broadcast %cst_19 : f32 to vector<2x128xf32>
    %66 = arith.subf %65, %58 : vector<2x128xf32>
    %67 = arith.mulf %66, %64 : vector<2x128xf32>
    %68 = arith.mulf %58, %39 : vector<2x128xf32>
    %69 = arith.addf %67, %68 : vector<2x128xf32>
    %70 = vector.extract_strided_slice %5 {offsets = [4, 0], sizes = [2, 384], strides = [1, 1]} : vector<16x384xf32> to vector<2x384xf32>
    %c0_20 = arith.constant 0 : index
    %c0_21 = arith.constant 0 : index
    %71 = vector.load %arg2[%c0_20, %c0_21] : memref<128x384xf32, #tpu.memory_space<vmem>>, vector<128x384xf32>
    %cst_22 = arith.constant dense<0.000000e+00> : vector<2x384xf32>
    %72 = tpu.matmul %69, %71, %cst_22 {dimension_numbers = #tpu.dot_dimension_numbers<[1], [0], [0], [1], [0, 0, 1, 1], [], []>} : vector<2x128xf32>, vector<128x384xf32>, vector<2x384xf32> -> vector<2x384xf32>
    %73 = vector.extract_strided_slice %70 {offsets = [0, 0], sizes = [2, 128], strides = [1, 1]} : vector<2x384xf32> to vector<2x128xf32>
    %74 = vector.extract_strided_slice %72 {offsets = [0, 0], sizes = [2, 128], strides = [1, 1]} : vector<2x384xf32> to vector<2x128xf32>
    %75 = arith.addf %73, %74 : vector<2x128xf32>
    %76 = arith.negf %75 : vector<2x128xf32>
    %77 = math.exp %76 : vector<2x128xf32>
    %cst_23 = arith.constant 1.000000e+00 : f32
    %78 = vector.broadcast %cst_23 : f32 to vector<2x128xf32>
    %79 = arith.addf %78, %77 : vector<2x128xf32>
    %80 = arith.divf %78, %79 : vector<2x128xf32>
    %81 = vector.extract_strided_slice %70 {offsets = [0, 128], sizes = [2, 128], strides = [1, 1]} : vector<2x384xf32> to vector<2x128xf32>
    %82 = vector.extract_strided_slice %72 {offsets = [0, 128], sizes = [2, 128], strides = [1, 1]} : vector<2x384xf32> to vector<2x128xf32>
    %83 = arith.addf %81, %82 : vector<2x128xf32>
    %84 = arith.negf %83 : vector<2x128xf32>
    %85 = math.exp %84 : vector<2x128xf32>
    %cst_24 = arith.constant 1.000000e+00 : f32
    %86 = vector.broadcast %cst_24 : f32 to vector<2x128xf32>
    %87 = arith.addf %86, %85 : vector<2x128xf32>
    %88 = arith.divf %86, %87 : vector<2x128xf32>
    %89 = vector.extract_strided_slice %70 {offsets = [0, 256], sizes = [2, 128], strides = [1, 1]} : vector<2x384xf32> to vector<2x128xf32>
    %90 = vector.extract_strided_slice %72 {offsets = [0, 256], sizes = [2, 128], strides = [1, 1]} : vector<2x384xf32> to vector<2x128xf32>
    %91 = arith.addf %90, %8 : vector<2x128xf32>
    %92 = arith.mulf %80, %91 : vector<2x128xf32>
    %93 = arith.addf %89, %92 : vector<2x128xf32>
    %94 = math.tanh %93 : vector<2x128xf32>
    %cst_25 = arith.constant 1.000000e+00 : f32
    %95 = vector.broadcast %cst_25 : f32 to vector<2x128xf32>
    %96 = arith.subf %95, %88 : vector<2x128xf32>
    %97 = arith.mulf %96, %94 : vector<2x128xf32>
    %98 = arith.mulf %88, %69 : vector<2x128xf32>
    %99 = arith.addf %97, %98 : vector<2x128xf32>
    %100 = vector.extract_strided_slice %5 {offsets = [6, 0], sizes = [2, 384], strides = [1, 1]} : vector<16x384xf32> to vector<2x384xf32>
    %c0_26 = arith.constant 0 : index
    %c0_27 = arith.constant 0 : index
    %101 = vector.load %arg2[%c0_26, %c0_27] : memref<128x384xf32, #tpu.memory_space<vmem>>, vector<128x384xf32>
    %cst_28 = arith.constant dense<0.000000e+00> : vector<2x384xf32>
    %102 = tpu.matmul %99, %101, %cst_28 {dimension_numbers = #tpu.dot_dimension_numbers<[1], [0], [0], [1], [0, 0, 1, 1], [], []>} : vector<2x128xf32>, vector<128x384xf32>, vector<2x384xf32> -> vector<2x384xf32>
    %103 = vector.extract_strided_slice %100 {offsets = [0, 0], sizes = [2, 128], strides = [1, 1]} : vector<2x384xf32> to vector<2x128xf32>
    %104 = vector.extract_strided_slice %102 {offsets = [0, 0], sizes = [2, 128], strides = [1, 1]} : vector<2x384xf32> to vector<2x128xf32>
    %105 = arith.addf %103, %104 : vector<2x128xf32>
    %106 = arith.negf %105 : vector<2x128xf32>
    %107 = math.exp %106 : vector<2x128xf32>
    %cst_29 = arith.constant 1.000000e+00 : f32
    %108 = vector.broadcast %cst_29 : f32 to vector<2x128xf32>
    %109 = arith.addf %108, %107 : vector<2x128xf32>
    %110 = arith.divf %108, %109 : vector<2x128xf32>
    %111 = vector.extract_strided_slice %100 {offsets = [0, 128], sizes = [2, 128], strides = [1, 1]} : vector<2x384xf32> to vector<2x128xf32>
    %112 = vector.extract_strided_slice %102 {offsets = [0, 128], sizes = [2, 128], strides = [1, 1]} : vector<2x384xf32> to vector<2x128xf32>
    %113 = arith.addf %111, %112 : vector<2x128xf32>
    %114 = arith.negf %113 : vector<2x128xf32>
    %115 = math.exp %114 : vector<2x128xf32>
    %cst_30 = arith.constant 1.000000e+00 : f32
    %116 = vector.broadcast %cst_30 : f32 to vector<2x128xf32>
    %117 = arith.addf %116, %115 : vector<2x128xf32>
    %118 = arith.divf %116, %117 : vector<2x128xf32>
    %119 = vector.extract_strided_slice %100 {offsets = [0, 256], sizes = [2, 128], strides = [1, 1]} : vector<2x384xf32> to vector<2x128xf32>
    %120 = vector.extract_strided_slice %102 {offsets = [0, 256], sizes = [2, 128], strides = [1, 1]} : vector<2x384xf32> to vector<2x128xf32>
    %121 = arith.addf %120, %8 : vector<2x128xf32>
    %122 = arith.mulf %110, %121 : vector<2x128xf32>
    %123 = arith.addf %119, %122 : vector<2x128xf32>
    %124 = math.tanh %123 : vector<2x128xf32>
    %cst_31 = arith.constant 1.000000e+00 : f32
    %125 = vector.broadcast %cst_31 : f32 to vector<2x128xf32>
    %126 = arith.subf %125, %118 : vector<2x128xf32>
    %127 = arith.mulf %126, %124 : vector<2x128xf32>
    %128 = arith.mulf %118, %99 : vector<2x128xf32>
    %129 = arith.addf %127, %128 : vector<2x128xf32>
    %130 = vector.extract_strided_slice %5 {offsets = [8, 0], sizes = [2, 384], strides = [1, 1]} : vector<16x384xf32> to vector<2x384xf32>
    %c0_32 = arith.constant 0 : index
    %c0_33 = arith.constant 0 : index
    %131 = vector.load %arg2[%c0_32, %c0_33] : memref<128x384xf32, #tpu.memory_space<vmem>>, vector<128x384xf32>
    %cst_34 = arith.constant dense<0.000000e+00> : vector<2x384xf32>
    %132 = tpu.matmul %129, %131, %cst_34 {dimension_numbers = #tpu.dot_dimension_numbers<[1], [0], [0], [1], [0, 0, 1, 1], [], []>} : vector<2x128xf32>, vector<128x384xf32>, vector<2x384xf32> -> vector<2x384xf32>
    %133 = vector.extract_strided_slice %130 {offsets = [0, 0], sizes = [2, 128], strides = [1, 1]} : vector<2x384xf32> to vector<2x128xf32>
    %134 = vector.extract_strided_slice %132 {offsets = [0, 0], sizes = [2, 128], strides = [1, 1]} : vector<2x384xf32> to vector<2x128xf32>
    %135 = arith.addf %133, %134 : vector<2x128xf32>
    %136 = arith.negf %135 : vector<2x128xf32>
    %137 = math.exp %136 : vector<2x128xf32>
    %cst_35 = arith.constant 1.000000e+00 : f32
    %138 = vector.broadcast %cst_35 : f32 to vector<2x128xf32>
    %139 = arith.addf %138, %137 : vector<2x128xf32>
    %140 = arith.divf %138, %139 : vector<2x128xf32>
    %141 = vector.extract_strided_slice %130 {offsets = [0, 128], sizes = [2, 128], strides = [1, 1]} : vector<2x384xf32> to vector<2x128xf32>
    %142 = vector.extract_strided_slice %132 {offsets = [0, 128], sizes = [2, 128], strides = [1, 1]} : vector<2x384xf32> to vector<2x128xf32>
    %143 = arith.addf %141, %142 : vector<2x128xf32>
    %144 = arith.negf %143 : vector<2x128xf32>
    %145 = math.exp %144 : vector<2x128xf32>
    %cst_36 = arith.constant 1.000000e+00 : f32
    %146 = vector.broadcast %cst_36 : f32 to vector<2x128xf32>
    %147 = arith.addf %146, %145 : vector<2x128xf32>
    %148 = arith.divf %146, %147 : vector<2x128xf32>
    %149 = vector.extract_strided_slice %130 {offsets = [0, 256], sizes = [2, 128], strides = [1, 1]} : vector<2x384xf32> to vector<2x128xf32>
    %150 = vector.extract_strided_slice %132 {offsets = [0, 256], sizes = [2, 128], strides = [1, 1]} : vector<2x384xf32> to vector<2x128xf32>
    %151 = arith.addf %150, %8 : vector<2x128xf32>
    %152 = arith.mulf %140, %151 : vector<2x128xf32>
    %153 = arith.addf %149, %152 : vector<2x128xf32>
    %154 = math.tanh %153 : vector<2x128xf32>
    %cst_37 = arith.constant 1.000000e+00 : f32
    %155 = vector.broadcast %cst_37 : f32 to vector<2x128xf32>
    %156 = arith.subf %155, %148 : vector<2x128xf32>
    %157 = arith.mulf %156, %154 : vector<2x128xf32>
    %158 = arith.mulf %148, %129 : vector<2x128xf32>
    %159 = arith.addf %157, %158 : vector<2x128xf32>
    %160 = vector.extract_strided_slice %5 {offsets = [10, 0], sizes = [2, 384], strides = [1, 1]} : vector<16x384xf32> to vector<2x384xf32>
    %c0_38 = arith.constant 0 : index
    %c0_39 = arith.constant 0 : index
    %161 = vector.load %arg2[%c0_38, %c0_39] : memref<128x384xf32, #tpu.memory_space<vmem>>, vector<128x384xf32>
    %cst_40 = arith.constant dense<0.000000e+00> : vector<2x384xf32>
    %162 = tpu.matmul %159, %161, %cst_40 {dimension_numbers = #tpu.dot_dimension_numbers<[1], [0], [0], [1], [0, 0, 1, 1], [], []>} : vector<2x128xf32>, vector<128x384xf32>, vector<2x384xf32> -> vector<2x384xf32>
    %163 = vector.extract_strided_slice %160 {offsets = [0, 0], sizes = [2, 128], strides = [1, 1]} : vector<2x384xf32> to vector<2x128xf32>
    %164 = vector.extract_strided_slice %162 {offsets = [0, 0], sizes = [2, 128], strides = [1, 1]} : vector<2x384xf32> to vector<2x128xf32>
    %165 = arith.addf %163, %164 : vector<2x128xf32>
    %166 = arith.negf %165 : vector<2x128xf32>
    %167 = math.exp %166 : vector<2x128xf32>
    %cst_41 = arith.constant 1.000000e+00 : f32
    %168 = vector.broadcast %cst_41 : f32 to vector<2x128xf32>
    %169 = arith.addf %168, %167 : vector<2x128xf32>
    %170 = arith.divf %168, %169 : vector<2x128xf32>
    %171 = vector.extract_strided_slice %160 {offsets = [0, 128], sizes = [2, 128], strides = [1, 1]} : vector<2x384xf32> to vector<2x128xf32>
    %172 = vector.extract_strided_slice %162 {offsets = [0, 128], sizes = [2, 128], strides = [1, 1]} : vector<2x384xf32> to vector<2x128xf32>
    %173 = arith.addf %171, %172 : vector<2x128xf32>
    %174 = arith.negf %173 : vector<2x128xf32>
    %175 = math.exp %174 : vector<2x128xf32>
    %cst_42 = arith.constant 1.000000e+00 : f32
    %176 = vector.broadcast %cst_42 : f32 to vector<2x128xf32>
    %177 = arith.addf %176, %175 : vector<2x128xf32>
    %178 = arith.divf %176, %177 : vector<2x128xf32>
    %179 = vector.extract_strided_slice %160 {offsets = [0, 256], sizes = [2, 128], strides = [1, 1]} : vector<2x384xf32> to vector<2x128xf32>
    %180 = vector.extract_strided_slice %162 {offsets = [0, 256], sizes = [2, 128], strides = [1, 1]} : vector<2x384xf32> to vector<2x128xf32>
    %181 = arith.addf %180, %8 : vector<2x128xf32>
    %182 = arith.mulf %170, %181 : vector<2x128xf32>
    %183 = arith.addf %179, %182 : vector<2x128xf32>
    %184 = math.tanh %183 : vector<2x128xf32>
    %cst_43 = arith.constant 1.000000e+00 : f32
    %185 = vector.broadcast %cst_43 : f32 to vector<2x128xf32>
    %186 = arith.subf %185, %178 : vector<2x128xf32>
    %187 = arith.mulf %186, %184 : vector<2x128xf32>
    %188 = arith.mulf %178, %159 : vector<2x128xf32>
    %189 = arith.addf %187, %188 : vector<2x128xf32>
    %190 = vector.extract_strided_slice %5 {offsets = [12, 0], sizes = [2, 384], strides = [1, 1]} : vector<16x384xf32> to vector<2x384xf32>
    %c0_44 = arith.constant 0 : index
    %c0_45 = arith.constant 0 : index
    %191 = vector.load %arg2[%c0_44, %c0_45] : memref<128x384xf32, #tpu.memory_space<vmem>>, vector<128x384xf32>
    %cst_46 = arith.constant dense<0.000000e+00> : vector<2x384xf32>
    %192 = tpu.matmul %189, %191, %cst_46 {dimension_numbers = #tpu.dot_dimension_numbers<[1], [0], [0], [1], [0, 0, 1, 1], [], []>} : vector<2x128xf32>, vector<128x384xf32>, vector<2x384xf32> -> vector<2x384xf32>
    %193 = vector.extract_strided_slice %190 {offsets = [0, 0], sizes = [2, 128], strides = [1, 1]} : vector<2x384xf32> to vector<2x128xf32>
    %194 = vector.extract_strided_slice %192 {offsets = [0, 0], sizes = [2, 128], strides = [1, 1]} : vector<2x384xf32> to vector<2x128xf32>
    %195 = arith.addf %193, %194 : vector<2x128xf32>
    %196 = arith.negf %195 : vector<2x128xf32>
    %197 = math.exp %196 : vector<2x128xf32>
    %cst_47 = arith.constant 1.000000e+00 : f32
    %198 = vector.broadcast %cst_47 : f32 to vector<2x128xf32>
    %199 = arith.addf %198, %197 : vector<2x128xf32>
    %200 = arith.divf %198, %199 : vector<2x128xf32>
    %201 = vector.extract_strided_slice %190 {offsets = [0, 128], sizes = [2, 128], strides = [1, 1]} : vector<2x384xf32> to vector<2x128xf32>
    %202 = vector.extract_strided_slice %192 {offsets = [0, 128], sizes = [2, 128], strides = [1, 1]} : vector<2x384xf32> to vector<2x128xf32>
    %203 = arith.addf %201, %202 : vector<2x128xf32>
    %204 = arith.negf %203 : vector<2x128xf32>
    %205 = math.exp %204 : vector<2x128xf32>
    %cst_48 = arith.constant 1.000000e+00 : f32
    %206 = vector.broadcast %cst_48 : f32 to vector<2x128xf32>
    %207 = arith.addf %206, %205 : vector<2x128xf32>
    %208 = arith.divf %206, %207 : vector<2x128xf32>
    %209 = vector.extract_strided_slice %190 {offsets = [0, 256], sizes = [2, 128], strides = [1, 1]} : vector<2x384xf32> to vector<2x128xf32>
    %210 = vector.extract_strided_slice %192 {offsets = [0, 256], sizes = [2, 128], strides = [1, 1]} : vector<2x384xf32> to vector<2x128xf32>
    %211 = arith.addf %210, %8 : vector<2x128xf32>
    %212 = arith.mulf %200, %211 : vector<2x128xf32>
    %213 = arith.addf %209, %212 : vector<2x128xf32>
    %214 = math.tanh %213 : vector<2x128xf32>
    %cst_49 = arith.constant 1.000000e+00 : f32
    %215 = vector.broadcast %cst_49 : f32 to vector<2x128xf32>
    %216 = arith.subf %215, %208 : vector<2x128xf32>
    %217 = arith.mulf %216, %214 : vector<2x128xf32>
    %218 = arith.mulf %208, %189 : vector<2x128xf32>
    %219 = arith.addf %217, %218 : vector<2x128xf32>
    %220 = vector.extract_strided_slice %5 {offsets = [14, 0], sizes = [2, 384], strides = [1, 1]} : vector<16x384xf32> to vector<2x384xf32>
    %c0_50 = arith.constant 0 : index
    %c0_51 = arith.constant 0 : index
    %221 = vector.load %arg2[%c0_50, %c0_51] : memref<128x384xf32, #tpu.memory_space<vmem>>, vector<128x384xf32>
    %cst_52 = arith.constant dense<0.000000e+00> : vector<2x384xf32>
    %222 = tpu.matmul %219, %221, %cst_52 {dimension_numbers = #tpu.dot_dimension_numbers<[1], [0], [0], [1], [0, 0, 1, 1], [], []>} : vector<2x128xf32>, vector<128x384xf32>, vector<2x384xf32> -> vector<2x384xf32>
    %223 = vector.extract_strided_slice %220 {offsets = [0, 0], sizes = [2, 128], strides = [1, 1]} : vector<2x384xf32> to vector<2x128xf32>
    %224 = vector.extract_strided_slice %222 {offsets = [0, 0], sizes = [2, 128], strides = [1, 1]} : vector<2x384xf32> to vector<2x128xf32>
    %225 = arith.addf %223, %224 : vector<2x128xf32>
    %226 = arith.negf %225 : vector<2x128xf32>
    %227 = math.exp %226 : vector<2x128xf32>
    %cst_53 = arith.constant 1.000000e+00 : f32
    %228 = vector.broadcast %cst_53 : f32 to vector<2x128xf32>
    %229 = arith.addf %228, %227 : vector<2x128xf32>
    %230 = arith.divf %228, %229 : vector<2x128xf32>
    %231 = vector.extract_strided_slice %220 {offsets = [0, 128], sizes = [2, 128], strides = [1, 1]} : vector<2x384xf32> to vector<2x128xf32>
    %232 = vector.extract_strided_slice %222 {offsets = [0, 128], sizes = [2, 128], strides = [1, 1]} : vector<2x384xf32> to vector<2x128xf32>
    %233 = arith.addf %231, %232 : vector<2x128xf32>
    %234 = arith.negf %233 : vector<2x128xf32>
    %235 = math.exp %234 : vector<2x128xf32>
    %cst_54 = arith.constant 1.000000e+00 : f32
    %236 = vector.broadcast %cst_54 : f32 to vector<2x128xf32>
    %237 = arith.addf %236, %235 : vector<2x128xf32>
    %238 = arith.divf %236, %237 : vector<2x128xf32>
    %239 = vector.extract_strided_slice %220 {offsets = [0, 256], sizes = [2, 128], strides = [1, 1]} : vector<2x384xf32> to vector<2x128xf32>
    %240 = vector.extract_strided_slice %222 {offsets = [0, 256], sizes = [2, 128], strides = [1, 1]} : vector<2x384xf32> to vector<2x128xf32>
    %241 = arith.addf %240, %8 : vector<2x128xf32>
    %242 = arith.mulf %230, %241 : vector<2x128xf32>
    %243 = arith.addf %239, %242 : vector<2x128xf32>
    %244 = math.tanh %243 : vector<2x128xf32>
    %cst_55 = arith.constant 1.000000e+00 : f32
    %245 = vector.broadcast %cst_55 : f32 to vector<2x128xf32>
    %246 = arith.subf %245, %238 : vector<2x128xf32>
    %247 = arith.mulf %246, %244 : vector<2x128xf32>
    %248 = arith.mulf %238, %219 : vector<2x128xf32>
    %249 = arith.addf %247, %248 : vector<2x128xf32>
    %c0_56 = arith.constant 0 : index
    %c0_57 = arith.constant 0 : index
    %250 = vector.load %arg5[%c0_56, %c0_57] : memref<128x128xf32, #tpu.memory_space<vmem>>, vector<128x128xf32>
    %cst_58 = arith.constant dense<0.000000e+00> : vector<2x128xf32>
    %251 = tpu.matmul %249, %250, %cst_58 {dimension_numbers = #tpu.dot_dimension_numbers<[1], [0], [0], [1], [0, 0, 1, 1], [], []>} : vector<2x128xf32>, vector<128x128xf32>, vector<2x128xf32> -> vector<2x128xf32>
    %c0_59 = arith.constant 0 : index
    %c0_60 = arith.constant 0 : index
    %252 = vector.load %arg6[%c0_59, %c0_60] : memref<1x128xf32, #tpu.memory_space<vmem>>, vector<1x128xf32>
    %253 = vector.broadcast %252 : vector<1x128xf32> to vector<2x128xf32>
    %254 = arith.addf %251, %253 : vector<2x128xf32>
    %c0_61 = arith.constant 0 : index
    %c0_62 = arith.constant 0 : index
    %255 = vector.load %arg7[%c0_61, %c0_62] : memref<2x128xf32, #tpu.memory_space<vmem>>, vector<2x128xf32>
    tpu.vector_store %arg7[%c0_61, %c0_62], %254 {strides = array<i32>} : memref<2x128xf32, #tpu.memory_space<vmem>>, vector<2x128xf32>,
    return
  }
}

</mosaic_0001>

<llo_original>
// kernel: tpu_custom_call.1
$region0: #{tpu_custom_call.1}
  #allocation0 [shape = 'u32[]', space=smem, size = 0x4, offset = 0x4, fixed_abs, tag = 'smem constant byte address 0x4 - core index']
  #allocation1 [shape = 'u32[144,128]{1,0:T(1,128)}', space=vmem, size = 0x12000, scoped, tag = 'internal scratch']
  %s0 = inlined_call_operand.hbm [shape: f32[16,26], index: 0, kind: input, shape index: {}]
  %s1 = inlined_call_operand.hbm [shape: f32[26,384], index: 1, kind: input, shape index: {}]
  %s2 = inlined_call_operand.hbm [shape: f32[128,384], index: 2, kind: input, shape index: {}]
  %s3 = inlined_call_operand.vmem [shape: f32[1,384], index: 3, kind: input, shape index: {}]
  %s4 = inlined_call_operand.vmem [shape: f32[1,128], index: 4, kind: input, shape index: {}]
  %s5 = inlined_call_operand.hbm [shape: f32[128,128], index: 5, kind: input, shape index: {}]
  %s6 = inlined_call_operand.vmem [shape: f32[1,128], index: 6, kind: input, shape index: {}]
  %s7 = inlined_call_operand.hbm [shape: f32[2,128], index: 7, kind: output, shape index: {}]
  %s8 = sld [smem:[#allocation0]]
  $region54: #{tpu_custom_call.1} parent=0
    _
  %s10 = ssub.s32 1, %s8
  %s11 = scalar_select 0, %s10, %s8
  $region1: #{tpu_custom_call.1} parent=0
    #allocation2 [shape = 'u8[8192]{0}', space=vmem, size = 0x2000, scoped, tag = 'input window, operand 0, single buffered']
    #allocation3 [shape = 's32[1]{0}', space=sflag, size = 0x4, scoped, tag = 'scoped memory for tpu_custom_call.1']
    #allocation4 [shape = 's32[1]{0}', space=sflag, size = 0x4, scoped, tag = 'scoped memory for tpu_custom_call.1']
    #allocation5 [shape = 'u8[49152]{0}', space=vmem, size = 0xc000, scoped, tag = 'input window, operand 1, single buffered']
    #allocation6 [shape = 's32[1]{0}', space=sflag, size = 0x4, scoped, tag = 'scoped memory for tpu_custom_call.1']
    #allocation7 [shape = 'u8[196608]{0}', space=vmem, size = 0x30000, scoped, tag = 'input window, operand 2, single buffered']
    #allocation8 [shape = 'u8[65536]{0}', space=vmem, size = 0x10000, scoped, tag = 'input window, operand 5, single buffered']
    #allocation9 [shape = 's32[1]{0}', space=sflag, size = 0x4, scoped, tag = 'scoped memory for tpu_custom_call.1']
    #allocation10 [shape = 'u8[1024]{0}', space=vmem, size = 0x400, scoped, tag = 'output window, operand 0, single buffered']
    %12 = vsyncpa [#allocation3], 0
    %13 = vsyncpa [#allocation6], 0
    %14 = vsyncpa [#allocation9], 0
    %15 = vsyncpa [#allocation4], 0
    // Predicated region
    $region2: #{tpu_custom_call.1} parent=1 // pred_check
      _
    $region3: #{tpu_custom_call.1} parent=1 // pred_check_branch
      %17 = sbr.rel (0) target = $region5
    $region4: #{tpu_custom_call.1} parent=1 // pred_region
      %s19 = ssub.s32 256, 256
      %20 = vsyncadd [#allocation3], %s19
      %s21 = sshll.u32 [#allocation2], 4
      %s22 = int_to_ptr.vmem [resolvable:$true] %s21
      %27 = dma.hbm_to_vmem [thread:$0]  %s0, 256, %s22, [#allocation3], 128, 128, 8
    $region5: #{tpu_custom_call.1} parent=1 // pred_fallthru
      _
    // Predicated region
    $region6: #{tpu_custom_call.1} parent=1 // pred_check
      _
    $region7: #{tpu_custom_call.1} parent=1 // pred_check_branch
      %29 = sbr.rel (0) target = $region9
    $region8: #{tpu_custom_call.1} parent=1 // pred_region
      %s31 = ssub.s32 1536, 1536
      %32 = vsyncadd [#allocation6], %s31
      %s33 = sshll.u32 [#allocation5], 4
      %s34 = int_to_ptr.vmem [resolvable:$true] %s33
      %39 = dma.hbm_to_vmem [thread:$0]  %s1, 1536, %s34, [#allocation6], 384, 384, 24
    $region9: #{tpu_custom_call.1} parent=1 // pred_fallthru
      _
    // Predicated region
    $region10: #{tpu_custom_call.1} parent=1 // pred_check
      _
    $region11: #{tpu_custom_call.1} parent=1 // pred_check_branch
      %41 = sbr.rel (0) target = $region13
    $region12: #{tpu_custom_call.1} parent=1 // pred_region
      %s43 = ssub.s32 6144, 6144
      %44 = vsyncadd [#allocation6], %s43
      %s45 = sshll.u32 [#allocation7], 4
      %s46 = int_to_ptr.vmem [resolvable:$true] %s45
      %51 = dma.hbm_to_vmem [thread:$0]  %s2, 6144, %s46, [#allocation6], 384, 384, 24
    $region13: #{tpu_custom_call.1} parent=1 // pred_fallthru
      _
    // Predicated region
    $region14: #{tpu_custom_call.1} parent=1 // pred_check
      _
    $region15: #{tpu_custom_call.1} parent=1 // pred_check_branch
      %53 = sbr.rel (0) target = $region17
    $region16: #{tpu_custom_call.1} parent=1 // pred_region
      _
    $region17: #{tpu_custom_call.1} parent=1 // pred_fallthru
      _
    // Predicated region
    $region18: #{tpu_custom_call.1} parent=1 // pred_check
      _
    $region19: #{tpu_custom_call.1} parent=1 // pred_check_branch
      %55 = sbr.rel (0) target = $region21
    $region20: #{tpu_custom_call.1} parent=1 // pred_region
      _
    $region21: #{tpu_custom_call.1} parent=1 // pred_fallthru
      _
    // Predicated region
    $region22: #{tpu_custom_call.1} parent=1 // pred_check
      _
    $region23: #{tpu_custom_call.1} parent=1 // pred_check_branch
      %57 = sbr.rel (0) target = $region25
    $region24: #{tpu_custom_call.1} parent=1 // pred_region
      %s59 = ssub.s32 2048, 2048
      %60 = vsyncadd [#allocation9], %s59
      %s61 = sshll.u32 [#allocation8], 4
      %s62 = int_to_ptr.vmem [resolvable:$true] %s61
      %67 = dma.hbm_to_vmem [thread:$0]  %s5, 2048, %s62, [#allocation9], 128, 128, 8
    $region25: #{tpu_custom_call.1} parent=1 // pred_fallthru
      _
    // Predicated region
    $region26: #{tpu_custom_call.1} parent=1 // pred_check
      _
    $region27: #{tpu_custom_call.1} parent=1 // pred_check_branch
      %69 = sbr.rel (0) target = $region29
    $region28: #{tpu_custom_call.1} parent=1 // pred_region
      _
    $region29: #{tpu_custom_call.1} parent=1 // pred_fallthru
      _
    // Predicated region
    $region30: #{tpu_custom_call.1} parent=1 // pred_check
      _
    $region31: #{tpu_custom_call.1} parent=1 // pred_check_branch
      %71 = sbr.rel (0) target = $region33
    $region32: #{tpu_custom_call.1} parent=1 // pred_region
      %72 = dma.done [#allocation3], 256
    $region33: #{tpu_custom_call.1} parent=1 // pred_fallthru
      _
    // Predicated region
    $region34: #{tpu_custom_call.1} parent=1 // pred_check
      _
    $region35: #{tpu_custom_call.1} parent=1 // pred_check_branch
      %74 = sbr.rel (0) target = $region37
    $region36: #{tpu_custom_call.1} parent=1 // pred_region
      %75 = dma.done [#allocation6], 1536
    $region37: #{tpu_custom_call.1} parent=1 // pred_fallthru
      _
    // Predicated region
    $region38: #{tpu_custom_call.1} parent=1 // pred_check
      _
    $region39: #{tpu_custom_call.1} parent=1 // pred_check_branch
      %77 = sbr.rel (0) target = $region41
    $region40: #{tpu_custom_call.1} parent=1 // pred_region
      %78 = dma.done [#allocation6], 6144
    $region41: #{tpu_custom_call.1} parent=1 // pred_fallthru
      _
    // Predicated region
    $region42: #{tpu_custom_call.1} parent=1 // pred_check
      _
    $region43: #{tpu_custom_call.1} parent=1 // pred_check_branch
      %80 = sbr.rel (0) target = $region45
    $region44: #{tpu_custom_call.1} parent=1 // pred_region
      %81 = dma.done [#allocation9], 2048
    $region45: #{tpu_custom_call.1} parent=1 // pred_fallthru
      _
    %v82 = vld [vmem:[#allocation2] sm:$0xff]
    %v83 = vld [vmem:[#allocation2 + $0x8] sm:$0xff]
    %v84 = vld [vmem:[#allocation5] sm:$0xff]
    %v85 = vld [vmem:[#allocation5 + $0x8] sm:$0xff]
    %v86 = vld [vmem:[#allocation5 + $0x10] sm:$0xff]
    %v87 = vld [vmem:[#allocation5 + $0x18] sm:$0xff]
    %v88 = vld [vmem:[#allocation5 + $0x20] sm:$0xff]
    %v89 = vld [vmem:[#allocation5 + $0x28] sm:$0xff]
    %v90 = vld [vmem:[#allocation5 + $0x30] sm:$0xff]
    %v91 = vld [vmem:[#allocation5 + $0x38] sm:$0xff]
    %v92 = vld [vmem:[#allocation5 + $0x40] sm:$0xff]
    %v93 = vld [vmem:[#allocation5 + $0x48] sm:$0x3]
    %v94 = vld [vmem:[#allocation5 + $0x50] sm:$0x3]
    %v95 = vld [vmem:[#allocation5 + $0x58] sm:$0x3]
    %v96 = vld [vmem:[%s3] sm:$0x7]
    %v98 = vlaneseq
    %v99 = vshrl.u32 %v98, 7
    %v100 = vsub.s32 0, %v99
    %v101 = vrot.slane %v96, %v100
    %v102 = vlaneseq
    %v103 = vshrl.u32 %v102, 7
    %v104 = vsub.s32 1, %v103
    %v105 = vrot.slane %v96, %v104
    %v106 = vlaneseq
    %v107 = vshrl.u32 %v106, 7
    %v108 = vsub.s32 2, %v107
    %v109 = vrot.slane %v96, %v108
    %vm113 = vcmask 211968
    %v115 = vsel %vm113, %v82, 0
    %v118 = vsel %vm113, %v83, 0
    %vm120 = vcmask 1041408
    %v122 = vsel %vm120, %v93, 0
    %v125 = vsel %vm120, %v94, 0
    %v128 = vsel %vm120, %v95, 0
    %130 = vmatprep.subr.mxu0 %v85
    %131 = vmatpush1.msra.mxu0 %v84
    %132 = vmatprep.subr.mxu0 %v88
    %133 = vmatpush1.msra.mxu0 %v87
    %134 = vmatprep.subr.mxu0 %v91
    %135 = vmatpush1.msra.mxu0 %v90
    %136 = vmatprep.subr.mxu0 %v125
    %137 = vmatpush1.msra.mxu0 %v122
    %138 = vmatprep.subr.mxu0 0.0
    %139 = vmatpush1.msra.mxu0 0.0
    %140 = vmatprep.subr.mxu0 0.0
    %141 = vmatpush1.msra.mxu0 0.0
    %142 = vmatprep.subr.mxu0 0.0
    %143 = vmatpush1.msra.mxu0 0.0
    %144 = vmatprep.subr.mxu0 0.0
    %145 = vmatpush1.msra.mxu0 0.0
    %146 = vmatprep.subr.mxu0 0.0
    %147 = vmatpush1.msra.mxu0 0.0
    %148 = vmatprep.subr.mxu0 0.0
    %149 = vmatpush1.msra.mxu0 0.0
    %150 = vmatprep.subr.mxu0 0.0
    %151 = vmatpush1.msra.mxu0 0.0
    %152 = vmatprep.subr.mxu0 0.0
    %153 = vmatpush1.msra.mxu0 0.0
    %154 = vmatprep.subr.mxu0 0.0
    %155 = vmatpush1.msra.mxu0 0.0
    %156 = vmatprep.subr.mxu0 0.0
    %157 = vmatpush1.msra.mxu0 0.0
    %158 = vmatprep.subr.mxu0 0.0
    %159 = vmatpush1.msra.mxu0 0.0
    %160 = vmatprep.subr.mxu0 0.0
    %161 = vmatpush1.msra.mxu0 0.0
    %162 = vmatprep.subr.mxu0 0.0
    %163 = vmatpush1.msra.mxu0 0.0
    %164 = vmatprep.subr.mxu0 0.0
    %165 = vmatpush1.msra.mxu0 0.0
    %166 = vmatprep.subr.mxu0 0.0
    %167 = vmatpush1.msra.mxu0 0.0
    %168 = vmatprep.subr.mxu0 0.0
    %169 = vmatpush1.msra.mxu0 0.0
    %170 = vmatprep.subr.mxu0 0.0
    %171 = vmatpush1.msra.mxu0 0.0
    %172 = vmatprep.subr.mxu0 0.0
    %173 = vmatpush1.msra.mxu0 0.0
    %174 = vmatprep.subr.mxu0 0.0
    %175 = vmatpush1.msra.mxu0 0.0
    %176 = vmatprep.subr.mxu0 0.0
    %177 = vmatpush1.msra.mxu0 0.0
    %178 = vmatprep.subr.mxu0 0.0
    %179 = vmatpush1.msra.mxu0 0.0
    %180 = vmatprep.subr.mxu0 0.0
    %181 = vmatpush1.msra.mxu0 0.0
    %182 = vmatprep.subr.mxu0 0.0
    %183 = vmatpush1.msra.mxu0 0.0
    %184 = vmatprep.subr.mxu0 0.0
    %185 = vmatpush1.msra.mxu0 0.0
    %186 = vmatprep.subr.mxu0 0.0
    %187 = vmatpush1.msra.mxu0 0.0
    %188 = vmatprep.subr.mxu0 0.0
    %189 = vmatpush1.msra.mxu0 0.0
    %190 = vmatprep.subr.mxu0 0.0
    %191 = vmatpush1.msra.mxu0 0.0
    %192 = vmatprep.subr.mxu0 0.0
    %193 = vmatpush1.msra.mxu0 0.0
    %194 = vmatprep.mubr.f32.mxu0 0.0
    %195 = vmatmul.mubr.f32.gmra.mrb[0].mxu0 %v115
    %v196 = vpop.f32.mrb[0].mxu0
    %v197 = vadd.f32 %v101, %v196
    %v198 = vpop.f32.mrb[0].mxu0
    %v199 = vadd.f32 %v105, %v198
    %200 = vmatprep.mubr.f32.mxu0 0.0
    %201 = vmatmul.mubr.f32.gmra.mrb[0].mxu0 %v118
    %v202 = vpop.f32.mrb[0].mxu0
    %v203 = vadd.f32 %v101, %v202
    %v204 = vpop.f32.mrb[0].mxu0
    %v205 = vadd.f32 %v105, %v204
    %206 = vdwg.mxu0
    %207 = vmatprep.subr.mxu0 0.0
    %208 = vmatpush1.msra.mxu0 %v86
    %209 = vmatprep.subr.mxu0 0.0
    %210 = vmatpush1.msra.mxu0 %v89
    %211 = vmatprep.subr.mxu0 0.0
    %212 = vmatpush1.msra.mxu0 %v92
    %213 = vmatprep.subr.mxu0 0.0
    %214 = vmatpush1.msra.mxu0 %v128
    %215 = vmatprep.subr.mxu0 0.0
    %216 = vmatpush1.msra.mxu0 0.0
    %217 = vmatprep.subr.mxu0 0.0
    %218 = vmatpush1.msra.mxu0 0.0
    %219 = vmatprep.subr.mxu0 0.0
    %220 = vmatpush1.msra.mxu0 0.0
    %221 = vmatprep.subr.mxu0 0.0
    %222 = vmatpush1.msra.mxu0 0.0
    %223 = vmatprep.subr.mxu0 0.0
    %224 = vmatpush1.msra.mxu0 0.0
    %225 = vmatprep.subr.mxu0 0.0
    %226 = vmatpush1.msra.mxu0 0.0
    %227 = vmatprep.subr.mxu0 0.0
    %228 = vmatpush1.msra.mxu0 0.0
    %229 = vmatprep.subr.mxu0 0.0
    %230 = vmatpush1.msra.mxu0 0.0
    %231 = vmatprep.subr.mxu0 0.0
    %232 = vmatpush1.msra.mxu0 0.0
    %233 = vmatprep.subr.mxu0 0.0
    %234 = vmatpush1.msra.mxu0 0.0
    %235 = vmatprep.subr.mxu0 0.0
    %236 = vmatpush1.msra.mxu0 0.0
    %237 = vmatprep.subr.mxu0 0.0
    %238 = vmatpush1.msra.mxu0 0.0
    %239 = vmatprep.subr.mxu0 0.0
    %240 = vmatpush1.msra.mxu0 0.0
    %241 = vmatprep.subr.mxu0 0.0
    %242 = vmatpush1.msra.mxu0 0.0
    %243 = vmatprep.subr.mxu0 0.0
    %244 = vmatpush1.msra.mxu0 0.0
    %245 = vmatprep.subr.mxu0 0.0
    %246 = vmatpush1.msra.mxu0 0.0
    %247 = vmatprep.subr.mxu0 0.0
    %248 = vmatpush1.msra.mxu0 0.0
    %249 = vmatprep.subr.mxu0 0.0
    %250 = vmatpush1.msra.mxu0 0.0
    %251 = vmatprep.subr.mxu0 0.0
    %252 = vmatpush1.msra.mxu0 0.0
    %253 = vmatprep.subr.mxu0 0.0
    %254 = vmatpush1.msra.mxu0 0.0
    %255 = vmatprep.subr.mxu0 0.0
    %256 = vmatpush1.msra.mxu0 0.0
    %257 = vmatprep.subr.mxu0 0.0
    %258 = vmatpush1.msra.mxu0 0.0
    %259 = vmatprep.subr.mxu0 0.0
    %260 = vmatpush1.msra.mxu0 0.0
    %261 = vmatprep.subr.mxu0 0.0
    %262 = vmatpush1.msra.mxu0 0.0
    %263 = vmatprep.subr.mxu0 0.0
    %264 = vmatpush1.msra.mxu0 0.0
    %265 = vmatprep.subr.mxu0 0.0
    %266 = vmatpush1.msra.mxu0 0.0
    %267 = vmatprep.subr.mxu0 0.0
    %268 = vmatpush1.msra.mxu0 0.0
    %269 = vmatprep.subr.mxu0 0.0
    %270 = vmatpush1.msra.mxu0 0.0
    %271 = vmatprep.mubr.f32.mxu0 0.0
    %272 = vmatmul.mubr.f32.gmra.mrb[0].mxu0 %v115
    %v273 = vpop.f32.mrb[0].mxu0
    %v274 = vadd.f32 %v109, %v273
    %v275 = vpop.f32.mrb[0].mxu0
    %276 = vmatprep.mubr.f32.mxu0 0.0
    %277 = vmatmul.mubr.f32.gmra.mrb[0].mxu0 %v118
    %v278 = vpop.f32.mrb[0].mxu0
    %v279 = vadd.f32 %v109, %v278
    %v280 = vpop.f32.mrb[0].mxu0
    %281 = vdwg.mxu0
    %v282 = vld [vmem:[%s4] sm:$0x1]
    %v284 = vlaneseq
    %v285 = vshrl.u32 %v284, 7
    %v286 = vsub.s32 0, %v285
    %v287 = vrot.slane %v282, %v286
    %v289 = vld [vmem:[#allocation7] sm:$0xff]
    %v290 = vld [vmem:[#allocation7 + $0x8] sm:$0xff]
    %v291 = vld [vmem:[#allocation7 + $0x10] sm:$0xff]
    %v292 = vld [vmem:[#allocation7 + $0x18] sm:$0xff]
    %v293 = vld [vmem:[#allocation7 + $0x20] sm:$0xff]
    %v294 = vld [vmem:[#allocation7 + $0x28] sm:$0xff]
    %v295 = vld [vmem:[#allocation7 + $0x30] sm:$0xff]
    %v296 = vld [vmem:[#allocation7 + $0x38] sm:$0xff]
    %v297 = vld [vmem:[#allocation7 + $0x40] sm:$0xff]
    %v298 = vld [vmem:[#allocation7 + $0x48] sm:$0xff]
    %v299 = vld [vmem:[#allocation7 + $0x50] sm:$0xff]
    %v300 = vld [vmem:[#allocation7 + $0x58] sm:$0xff]
    %v301 = vld [vmem:[#allocation7 + $0x60] sm:$0xff]
    %v302 = vld [vmem:[#allocation7 + $0x68] sm:$0xff]
    %v303 = vld [vmem:[#allocation7 + $0x70] sm:$0xff]
    %v304 = vld [vmem:[#allocation7 + $0x78] sm:$0xff]
    %v305 = vld [vmem:[#allocation7 + $0x80] sm:$0xff]
    %v306 = vld [vmem:[#allocation7 + $0x88] sm:$0xff]
    %v307 = vld [vmem:[#allocation7 + $0x90] sm:$0xff]
    %v308 = vld [vmem:[#allocation7 + $0x98] sm:$0xff]
    %v309 = vld [vmem:[#allocation7 + $0xa0] sm:$0xff]
    %v310 = vld [vmem:[#allocation7 + $0xa8] sm:$0xff]
    %v311 = vld [vmem:[#allocation7 + $0xb0] sm:$0xff]
    %v312 = vld [vmem:[#allocation7 + $0xb8] sm:$0xff]
    %v313 = vld [vmem:[#allocation7 + $0xc0] sm:$0xff]
    %v314 = vld [vmem:[#allocation7 + $0xc8] sm:$0xff]
    %v315 = vld [vmem:[#allocation7 + $0xd0] sm:$0xff]
    %v316 = vld [vmem:[#allocation7 + $0xd8] sm:$0xff]
    %v317 = vld [vmem:[#allocation7 + $0xe0] sm:$0xff]
    %v318 = vld [vmem:[#allocation7 + $0xe8] sm:$0xff]
    %v319 = vld [vmem:[#allocation7 + $0xf0] sm:$0xff]
    %v320 = vld [vmem:[#allocation7 + $0xf8] sm:$0xff]
    %v321 = vld [vmem:[#allocation7 + $0x100] sm:$0xff]
    %v322 = vld [vmem:[#allocation7 + $0x108] sm:$0xff]
    %v323 = vld [vmem:[#allocation7 + $0x110] sm:$0xff]
    %v324 = vld [vmem:[#allocation7 + $0x118] sm:$0xff]
    %v325 = vld [vmem:[#allocation7 + $0x120] sm:$0xff]
    %v326 = vld [vmem:[#allocation7 + $0x128] sm:$0xff]
    %v327 = vld [vmem:[#allocation7 + $0x130] sm:$0xff]
    %v328 = vld [vmem:[#allocation7 + $0x138] sm:$0xff]
    %v329 = vld [vmem:[#allocation7 + $0x140] sm:$0xff]
    %v330 = vld [vmem:[#allocation7 + $0x148] sm:$0xff]
    %v331 = vld [vmem:[#allocation7 + $0x150] sm:$0xff]
    %v332 = vld [vmem:[#allocation7 + $0x158] sm:$0xff]
    %v333 = vld [vmem:[#allocation7 + $0x160] sm:$0xff]
    %v334 = vld [vmem:[#allocation7 + $0x168] sm:$0xff]
    %v335 = vld [vmem:[#allocation7 + $0x170] sm:$0xff]
    %v336 = vld [vmem:[#allocation7 + $0x178] sm:$0xff]
    %337 = vmatprep.subr.mxu0 %v290
    %338 = vmatpush1.msra.mxu0 %v289
    %339 = vmatprep.subr.mxu0 %v293
    %340 = vmatpush1.msra.mxu0 %v292
    %341 = vmatprep.subr.mxu0 %v296
    %342 = vmatpush1.msra.mxu0 %v295
    %343 = vmatprep.subr.mxu0 %v299
    %344 = vmatpush1.msra.mxu0 %v298
    %345 = vmatprep.subr.mxu0 %v302
    %346 = vmatpush1.msra.mxu0 %v301
    %347 = vmatprep.subr.mxu0 %v305
    %348 = vmatpush1.msra.mxu0 %v304
    %349 = vmatprep.subr.mxu0 %v308
    %350 = vmatpush1.msra.mxu0 %v307
    %351 = vmatprep.subr.mxu0 %v311
    %352 = vmatpush1.msra.mxu0 %v310
    %353 = vmatprep.subr.mxu0 %v314
    %354 = vmatpush1.msra.mxu0 %v313
    %355 = vmatprep.subr.mxu0 %v317
    %356 = vmatpush1.msra.mxu0 %v316
    %357 = vmatprep.subr.mxu0 %v320
    %358 = vmatpush1.msra.mxu0 %v319
    %359 = vmatprep.subr.mxu0 %v323
    %360 = vmatpush1.msra.mxu0 %v322
    %361 = vmatprep.subr.mxu0 %v326
    %362 = vmatpush1.msra.mxu0 %v325
    %363 = vmatprep.subr.mxu0 %v329
    %364 = vmatpush1.msra.mxu0 %v328
    %365 = vmatprep.subr.mxu0 %v332
    %366 = vmatpush1.msra.mxu0 %v331
    %367 = vmatprep.subr.mxu0 %v335
    %368 = vmatpush1.msra.mxu0 %v334
    %369 = vmatprep.subr.mxu0 0.0
    %370 = vmatpush1.msra.mxu0 0.0
    %371 = vmatprep.subr.mxu0 0.0
    %372 = vmatpush1.msra.mxu0 0.0
    %373 = vmatprep.subr.mxu0 0.0
    %374 = vmatpush1.msra.mxu0 0.0
    %375 = vmatprep.subr.mxu0 0.0
    %376 = vmatpush1.msra.mxu0 0.0
    %377 = vmatprep.subr.mxu0 0.0
    %378 = vmatpush1.msra.mxu0 0.0
    %379 = vmatprep.subr.mxu0 0.0
    %380 = vmatpush1.msra.mxu0 0.0
    %381 = vmatprep.subr.mxu0 0.0
    %382 = vmatpush1.msra.mxu0 0.0
    %383 = vmatprep.subr.mxu0 0.0
    %384 = vmatpush1.msra.mxu0 0.0
    %385 = vmatprep.subr.mxu0 0.0
    %386 = vmatpush1.msra.mxu0 0.0
    %387 = vmatprep.subr.mxu0 0.0
    %388 = vmatpush1.msra.mxu0 0.0
    %389 = vmatprep.subr.mxu0 0.0
    %390 = vmatpush1.msra.mxu0 0.0
    %391 = vmatprep.subr.mxu0 0.0
    %392 = vmatpush1.msra.mxu0 0.0
    %393 = vmatprep.subr.mxu0 0.0
    %394 = vmatpush1.msra.mxu0 0.0
    %395 = vmatprep.subr.mxu0 0.0
    %396 = vmatpush1.msra.mxu0 0.0
    %397 = vmatprep.subr.mxu0 0.0
    %398 = vmatpush1.msra.mxu0 0.0
    %399 = vmatprep.subr.mxu0 0.0
    %400 = vmatpush1.msra.mxu0 0.0
    %401 = vmatprep.mubr.f32.mxu0 0.0
    %402 = vmatmul.mubr.f32.gmra.mrb[0].mxu0 0.0
    %v403 = vpop.f32.mrb[0].mxu0
    %v404 = vadd.f32 0.0, %v403
    %v405 = vpop.f32.mrb[0].mxu0
    %v406 = vadd.f32 0.0, %v405
    %407 = vdwg.mxu0
    %408 = vmatprep.subr.mxu0 0.0
    %409 = vmatpush1.msra.mxu0 %v291
    %410 = vmatprep.subr.mxu0 0.0
    %411 = vmatpush1.msra.mxu0 %v294
    %412 = vmatprep.subr.mxu0 0.0
    %413 = vmatpush1.msra.mxu0 %v297
    %414 = vmatprep.subr.mxu0 0.0
    %415 = vmatpush1.msra.mxu0 %v300
    %416 = vmatprep.subr.mxu0 0.0
    %417 = vmatpush1.msra.mxu0 %v303
    %418 = vmatprep.subr.mxu0 0.0
    %419 = vmatpush1.msra.mxu0 %v306
    %420 = vmatprep.subr.mxu0 0.0
    %421 = vmatpush1.msra.mxu0 %v309
    %422 = vmatprep.subr.mxu0 0.0
    %423 = vmatpush1.msra.mxu0 %v312
    %424 = vmatprep.subr.mxu0 0.0
    %425 = vmatpush1.msra.mxu0 %v315
    %426 = vmatprep.subr.mxu0 0.0
    %427 = vmatpush1.msra.mxu0 %v318
    %428 = vmatprep.subr.mxu0 0.0
    %429 = vmatpush1.msra.mxu0 %v321
    %430 = vmatprep.subr.mxu0 0.0
    %431 = vmatpush1.msra.mxu0 %v324
    %432 = vmatprep.subr.mxu0 0.0
    %433 = vmatpush1.msra.mxu0 %v327
    %434 = vmatprep.subr.mxu0 0.0
    %435 = vmatpush1.msra.mxu0 %v330
    %436 = vmatprep.subr.mxu0 0.0
    %437 = vmatpush1.msra.mxu0 %v333
    %438 = vmatprep.subr.mxu0 0.0
    %439 = vmatpush1.msra.mxu0 %v336
    %440 = vmatprep.subr.mxu0 0.0
    %441 = vmatpush1.msra.mxu0 0.0
    %442 = vmatprep.subr.mxu0 0.0
    %443 = vmatpush1.msra.mxu0 0.0
    %444 = vmatprep.subr.mxu0 0.0
    %445 = vmatpush1.msra.mxu0 0.0
    %446 = vmatprep.subr.mxu0 0.0
    %447 = vmatpush1.msra.mxu0 0.0
    %448 = vmatprep.subr.mxu0 0.0
    %449 = vmatpush1.msra.mxu0 0.0
    %450 = vmatprep.subr.mxu0 0.0
    %451 = vmatpush1.msra.mxu0 0.0
    %452 = vmatprep.subr.mxu0 0.0
    %453 = vmatpush1.msra.mxu0 0.0
    %454 = vmatprep.subr.mxu0 0.0
    %455 = vmatpush1.msra.mxu0 0.0
    %456 = vmatprep.subr.mxu0 0.0
    %457 = vmatpush1.msra.mxu0 0.0
    %458 = vmatprep.subr.mxu0 0.0
    %459 = vmatpush1.msra.mxu0 0.0
    %460 = vmatprep.subr.mxu0 0.0
    %461 = vmatpush1.msra.mxu0 0.0
    %462 = vmatprep.subr.mxu0 0.0
    %463 = vmatpush1.msra.mxu0 0.0
    %464 = vmatprep.subr.mxu0 0.0
    %465 = vmatpush1.msra.mxu0 0.0
    %466 = vmatprep.subr.mxu0 0.0
    %467 = vmatpush1.msra.mxu0 0.0
    %468 = vmatprep.subr.mxu0 0.0
    %469 = vmatpush1.msra.mxu0 0.0
    %470 = vmatprep.subr.mxu0 0.0
    %471 = vmatpush1.msra.mxu0 0.0
    %472 = vmatprep.mubr.f32.mxu0 0.0
    %473 = vmatmul.mubr.f32.gmra.mrb[0].mxu0 0.0
    %v474 = vpop.f32.mrb[0].mxu0
    %v475 = vadd.f32 0.0, %v474
    %v476 = vpop.f32.mrb[0].mxu0
    %477 = vdwg.mxu0
    %v478 = vadd.f32 %v197, %v404
    %v479 = vxor.u32 %v478, 2147483648
    %v480 = vmul.f32 %v479, 1.442695
    %v481 = vpow.pop %v480
    %v482 = vadd.f32 %v481, 1.0
    %v483 = vrcp.pop %v482
    %v484 = vmul.f32 1.0, %v483
    %v485 = vadd.f32 %v199, %v406
    %v486 = vxor.u32 %v485, 2147483648
    %v487 = vmul.f32 %v486, 1.442695
    %v488 = vpow.pop %v487
    %v489 = vadd.f32 %v488, 1.0
    %v490 = vrcp.pop %v489
    %v491 = vmul.f32 1.0, %v490
    %v492 = vadd.f32 %v475, %v287
    %v493 = vmul.f32 %v484, %v492
    %v494 = vadd.f32 %v274, %v493
    %v495 = vtanh.pop %v494
    %v496 = vsub.f32 1.0, %v491
    %v497 = vmul.f32 %v496, %v495
    %v498 = vmul.f32 %v491, 0.0
    %v499 = vadd.f32 %v497, %v498
    %500 = vmatprep.subr.mxu0 %v290
    %501 = vmatpush1.msra.mxu0 %v289
    %502 = vmatprep.subr.mxu0 %v293
    %503 = vmatpush1.msra.mxu0 %v292
    %504 = vmatprep.subr.mxu0 %v296
    %505 = vmatpush1.msra.mxu0 %v295
    %506 = vmatprep.subr.mxu0 %v299
    %507 = vmatpush1.msra.mxu0 %v298
    %508 = vmatprep.subr.mxu0 %v302
    %509 = vmatpush1.msra.mxu0 %v301
    %510 = vmatprep.subr.mxu0 %v305
    %511 = vmatpush1.msra.mxu0 %v304
    %512 = vmatprep.subr.mxu0 %v308
    %513 = vmatpush1.msra.mxu0 %v307
    %514 = vmatprep.subr.mxu0 %v311
    %515 = vmatpush1.msra.mxu0 %v310
    %516 = vmatprep.subr.mxu0 %v314
    %517 = vmatpush1.msra.mxu0 %v313
    %518 = vmatprep.subr.mxu0 %v317
    %519 = vmatpush1.msra.mxu0 %v316
    %520 = vmatprep.subr.mxu0 %v320
    %521 = vmatpush1.msra.mxu0 %v319
    %522 = vmatprep.subr.mxu0 %v323
    %523 = vmatpush1.msra.mxu0 %v322
    %524 = vmatprep.subr.mxu0 %v326
    %525 = vmatpush1.msra.mxu0 %v325
    %526 = vmatprep.subr.mxu0 %v329
    %527 = vmatpush1.msra.mxu0 %v328
    %528 = vmatprep.subr.mxu0 %v332
    %529 = vmatpush1.msra.mxu0 %v331
    %530 = vmatprep.subr.mxu0 %v335
    %531 = vmatpush1.msra.mxu0 %v334
    %532 = vmatprep.subr.mxu0 0.0
    %533 = vmatpush1.msra.mxu0 0.0
    %534 = vmatprep.subr.mxu0 0.0
    %535 = vmatpush1.msra.mxu0 0.0
    %536 = vmatprep.subr.mxu0 0.0
    %537 = vmatpush1.msra.mxu0 0.0
    %538 = vmatprep.subr.mxu0 0.0
    %539 = vmatpush1.msra.mxu0 0.0
    %540 = vmatprep.subr.mxu0 0.0
    %541 = vmatpush1.msra.mxu0 0.0
    %542 = vmatprep.subr.mxu0 0.0
    %543 = vmatpush1.msra.mxu0 0.0
    %544 = vmatprep.subr.mxu0 0.0
    %545 = vmatpush1.msra.mxu0 0.0
    %546 = vmatprep.subr.mxu0 0.0
    %547 = vmatpush1.msra.mxu0 0.0
    %548 = vmatprep.subr.mxu0 0.0
    %549 = vmatpush1.msra.mxu0 0.0
    %550 = vmatprep.subr.mxu0 0.0
    %551 = vmatpush1.msra.mxu0 0.0
    %552 = vmatprep.subr.mxu0 0.0
    %553 = vmatpush1.msra.mxu0 0.0
    %554 = vmatprep.subr.mxu0 0.0
    %555 = vmatpush1.msra.mxu0 0.0
    %556 = vmatprep.subr.mxu0 0.0
    %557 = vmatpush1.msra.mxu0 0.0
    %558 = vmatprep.subr.mxu0 0.0
    %559 = vmatpush1.msra.mxu0 0.0
    %560 = vmatprep.subr.mxu0 0.0
    %561 = vmatpush1.msra.mxu0 0.0
    %562 = vmatprep.subr.mxu0 0.0
    %563 = vmatpush1.msra.mxu0 0.0
    %564 = vmatprep.mubr.f32.mxu0 0.0
    %565 = vmatmul.mubr.f32.gmra.mrb[0].mxu0 %v499
    %v566 = vpop.f32.mrb[0].mxu0
    %v567 = vadd.f32 0.0, %v566
    %v568 = vpop.f32.mrb[0].mxu0
    %v569 = vadd.f32 0.0, %v568
    %570 = vdwg.mxu0
    %571 = vmatprep.subr.mxu0 0.0
    %572 = vmatpush1.msra.mxu0 %v291
    %573 = vmatprep.subr.mxu0 0.0
    %574 = vmatpush1.msra.mxu0 %v294
    %575 = vmatprep.subr.mxu0 0.0
    %576 = vmatpush1.msra.mxu0 %v297
    %577 = vmatprep.subr.mxu0 0.0
    %578 = vmatpush1.msra.mxu0 %v300
    %579 = vmatprep.subr.mxu0 0.0
    %580 = vmatpush1.msra.mxu0 %v303
    %581 = vmatprep.subr.mxu0 0.0
    %582 = vmatpush1.msra.mxu0 %v306
    %583 = vmatprep.subr.mxu0 0.0
    %584 = vmatpush1.msra.mxu0 %v309
    %585 = vmatprep.subr.mxu0 0.0
    %586 = vmatpush1.msra.mxu0 %v312
    %587 = vmatprep.subr.mxu0 0.0
    %588 = vmatpush1.msra.mxu0 %v315
    %589 = vmatprep.subr.mxu0 0.0
    %590 = vmatpush1.msra.mxu0 %v318
    %591 = vmatprep.subr.mxu0 0.0
    %592 = vmatpush1.msra.mxu0 %v321
    %593 = vmatprep.subr.mxu0 0.0
    %594 = vmatpush1.msra.mxu0 %v324
    %595 = vmatprep.subr.mxu0 0.0
    %596 = vmatpush1.msra.mxu0 %v327
    %597 = vmatprep.subr.mxu0 0.0
    %598 = vmatpush1.msra.mxu0 %v330
    %599 = vmatprep.subr.mxu0 0.0
    %600 = vmatpush1.msra.mxu0 %v333
    %601 = vmatprep.subr.mxu0 0.0
    %602 = vmatpush1.msra.mxu0 %v336
    %603 = vmatprep.subr.mxu0 0.0
    %604 = vmatpush1.msra.mxu0 0.0
    %605 = vmatprep.subr.mxu0 0.0
    %606 = vmatpush1.msra.mxu0 0.0
    %607 = vmatprep.subr.mxu0 0.0
    %608 = vmatpush1.msra.mxu0 0.0
    %609 = vmatprep.subr.mxu0 0.0
    %610 = vmatpush1.msra.mxu0 0.0
    %611 = vmatprep.subr.mxu0 0.0
    %612 = vmatpush1.msra.mxu0 0.0
    %613 = vmatprep.subr.mxu0 0.0
    %614 = vmatpush1.msra.mxu0 0.0
    %615 = vmatprep.subr.mxu0 0.0
    %616 = vmatpush1.msra.mxu0 0.0
    %617 = vmatprep.subr.mxu0 0.0
    %618 = vmatpush1.msra.mxu0 0.0
    %619 = vmatprep.subr.mxu0 0.0
    %620 = vmatpush1.msra.mxu0 0.0
    %621 = vmatprep.subr.mxu0 0.0
    %622 = vmatpush1.msra.mxu0 0.0
    %623 = vmatprep.subr.mxu0 0.0
    %624 = vmatpush1.msra.mxu0 0.0
    %625 = vmatprep.subr.mxu0 0.0
    %626 = vmatpush1.msra.mxu0 0.0
    %627 = vmatprep.subr.mxu0 0.0
    %628 = vmatpush1.msra.mxu0 0.0
    %629 = vmatprep.subr.mxu0 0.0
    %630 = vmatpush1.msra.mxu0 0.0
    %631 = vmatprep.subr.mxu0 0.0
    %632 = vmatpush1.msra.mxu0 0.0
    %633 = vmatprep.subr.mxu0 0.0
    %634 = vmatpush1.msra.mxu0 0.0
    %635 = vmatprep.mubr.f32.mxu0 0.0
    %636 = vmatmul.mubr.f32.gmra.mrb[0].mxu0 %v499
    %v637 = vpop.f32.mrb[0].mxu0
    %v638 = vadd.f32 0.0, %v637
    %v639 = vpop.f32.mrb[0].mxu0
    %640 = vdwg.mxu0
    %v642 = vrot.slane %v567, 6
    %v644 = vadd.f32 %v197, %v642
    %v645 = vxor.u32 %v644, 2147483648
    %v646 = vmul.f32 %v645, 1.442695
    %v647 = vpow.pop %v646
    %v648 = vadd.f32 %v647, 1.0
    %v649 = vrcp.pop %v648
    %v650 = vmul.f32 1.0, %v649
    %v652 = vrot.slane %v569, 6
    %v654 = vadd.f32 %v199, %v652
    %v655 = vxor.u32 %v654, 2147483648
    %v656 = vmul.f32 %v655, 1.442695
    %v657 = vpow.pop %v656
    %v658 = vadd.f32 %v657, 1.0
    %v659 = vrcp.pop %v658
    %v660 = vmul.f32 1.0, %v659
    %v661 = vadd.f32 %v638, %v287
    %v663 = vrot.slane %v661, 6
    %v665 = vmul.f32 %v650, %v663
    %v666 = vadd.f32 %v274, %v665
    %v667 = vtanh.pop %v666
    %v668 = vsub.f32 1.0, %v660
    %v669 = vmul.f32 %v668, %v667
    %v671 = vrot.slane %v499, 6
    %v673 = vmul.f32 %v660, %v671
    %v674 = vadd.f32 %v669, %v673
    %v676 = vrot.slane %v674, 2
    %678 = vmatprep.subr.mxu0 %v290
    %679 = vmatpush1.msra.mxu0 %v289
    %680 = vmatprep.subr.mxu0 %v293
    %681 = vmatpush1.msra.mxu0 %v292
    %682 = vmatprep.subr.mxu0 %v296
    %683 = vmatpush1.msra.mxu0 %v295
    %684 = vmatprep.subr.mxu0 %v299
    %685 = vmatpush1.msra.mxu0 %v298
    %686 = vmatprep.subr.mxu0 %v302
    %687 = vmatpush1.msra.mxu0 %v301
    %688 = vmatprep.subr.mxu0 %v305
    %689 = vmatpush1.msra.mxu0 %v304
    %690 = vmatprep.subr.mxu0 %v308
    %691 = vmatpush1.msra.mxu0 %v307
    %692 = vmatprep.subr.mxu0 %v311
    %693 = vmatpush1.msra.mxu0 %v310
    %694 = vmatprep.subr.mxu0 %v314
    %695 = vmatpush1.msra.mxu0 %v313
    %696 = vmatprep.subr.mxu0 %v317
    %697 = vmatpush1.msra.mxu0 %v316
    %698 = vmatprep.subr.mxu0 %v320
    %699 = vmatpush1.msra.mxu0 %v319
    %700 = vmatprep.subr.mxu0 %v323
    %701 = vmatpush1.msra.mxu0 %v322
    %702 = vmatprep.subr.mxu0 %v326
    %703 = vmatpush1.msra.mxu0 %v325
    %704 = vmatprep.subr.mxu0 %v329
    %705 = vmatpush1.msra.mxu0 %v328
    %706 = vmatprep.subr.mxu0 %v332
    %707 = vmatpush1.msra.mxu0 %v331
    %708 = vmatprep.subr.mxu0 %v335
    %709 = vmatpush1.msra.mxu0 %v334
    %710 = vmatprep.subr.mxu0 0.0
    %711 = vmatpush1.msra.mxu0 0.0
    %712 = vmatprep.subr.mxu0 0.0
    %713 = vmatpush1.msra.mxu0 0.0
    %714 = vmatprep.subr.mxu0 0.0
    %715 = vmatpush1.msra.mxu0 0.0
    %716 = vmatprep.subr.mxu0 0.0
    %717 = vmatpush1.msra.mxu0 0.0
    %718 = vmatprep.subr.mxu0 0.0
    %719 = vmatpush1.msra.mxu0 0.0
    %720 = vmatprep.subr.mxu0 0.0
    %721 = vmatpush1.msra.mxu0 0.0
    %722 = vmatprep.subr.mxu0 0.0
    %723 = vmatpush1.msra.mxu0 0.0
    %724 = vmatprep.subr.mxu0 0.0
    %725 = vmatpush1.msra.mxu0 0.0
    %726 = vmatprep.subr.mxu0 0.0
    %727 = vmatpush1.msra.mxu0 0.0
    %728 = vmatprep.subr.mxu0 0.0
    %729 = vmatpush1.msra.mxu0 0.0
    %730 = vmatprep.subr.mxu0 0.0
    %731 = vmatpush1.msra.mxu0 0.0
    %732 = vmatprep.subr.mxu0 0.0
    %733 = vmatpush1.msra.mxu0 0.0
    %734 = vmatprep.subr.mxu0 0.0
    %735 = vmatpush1.msra.mxu0 0.0
    %736 = vmatprep.subr.mxu0 0.0
    %737 = vmatpush1.msra.mxu0 0.0
    %738 = vmatprep.subr.mxu0 0.0
    %739 = vmatpush1.msra.mxu0 0.0
    %740 = vmatprep.subr.mxu0 0.0
    %741 = vmatpush1.msra.mxu0 0.0
    %742 = vmatprep.mubr.f32.mxu0 0.0
    %743 = vmatmul.mubr.f32.gmra.mrb[0].mxu0 %v676
    %v744 = vpop.f32.mrb[0].mxu0
    %v745 = vadd.f32 0.0, %v744
    %v746 = vpop.f32.mrb[0].mxu0
    %v747 = vadd.f32 0.0, %v746
    %748 = vdwg.mxu0
    %749 = vmatprep.subr.mxu0 0.0
    %750 = vmatpush1.msra.mxu0 %v291
    %751 = vmatprep.subr.mxu0 0.0
    %752 = vmatpush1.msra.mxu0 %v294
    %753 = vmatprep.subr.mxu0 0.0
    %754 = vmatpush1.msra.mxu0 %v297
    %755 = vmatprep.subr.mxu0 0.0
    %756 = vmatpush1.msra.mxu0 %v300
    %757 = vmatprep.subr.mxu0 0.0
    %758 = vmatpush1.msra.mxu0 %v303
    %759 = vmatprep.subr.mxu0 0.0
    %760 = vmatpush1.msra.mxu0 %v306
    %761 = vmatprep.subr.mxu0 0.0
    %762 = vmatpush1.msra.mxu0 %v309
    %763 = vmatprep.subr.mxu0 0.0
    %764 = vmatpush1.msra.mxu0 %v312
    %765 = vmatprep.subr.mxu0 0.0
    %766 = vmatpush1.msra.mxu0 %v315
    %767 = vmatprep.subr.mxu0 0.0
    %768 = vmatpush1.msra.mxu0 %v318
    %769 = vmatprep.subr.mxu0 0.0
    %770 = vmatpush1.msra.mxu0 %v321
    %771 = vmatprep.subr.mxu0 0.0
    %772 = vmatpush1.msra.mxu0 %v324
    %773 = vmatprep.subr.mxu0 0.0
    %774 = vmatpush1.msra.mxu0 %v327
    %775 = vmatprep.subr.mxu0 0.0
    %776 = vmatpush1.msra.mxu0 %v330
    %777 = vmatprep.subr.mxu0 0.0
    %778 = vmatpush1.msra.mxu0 %v333
    %779 = vmatprep.subr.mxu0 0.0
    %780 = vmatpush1.msra.mxu0 %v336
    %781 = vmatprep.subr.mxu0 0.0
    %782 = vmatpush1.msra.mxu0 0.0
    %783 = vmatprep.subr.mxu0 0.0
    %784 = vmatpush1.msra.mxu0 0.0
    %785 = vmatprep.subr.mxu0 0.0
    %786 = vmatpush1.msra.mxu0 0.0
    %787 = vmatprep.subr.mxu0 0.0
    %788 = vmatpush1.msra.mxu0 0.0
    %789 = vmatprep.subr.mxu0 0.0
    %790 = vmatpush1.msra.mxu0 0.0
    %791 = vmatprep.subr.mxu0 0.0
    %792 = vmatpush1.msra.mxu0 0.0
    %793 = vmatprep.subr.mxu0 0.0
    %794 = vmatpush1.msra.mxu0 0.0
    %795 = vmatprep.subr.mxu0 0.0
    %796 = vmatpush1.msra.mxu0 0.0
    %797 = vmatprep.subr.mxu0 0.0
    %798 = vmatpush1.msra.mxu0 0.0
    %799 = vmatprep.subr.mxu0 0.0
    %800 = vmatpush1.msra.mxu0 0.0
    %801 = vmatprep.subr.mxu0 0.0
    %802 = vmatpush1.msra.mxu0 0.0
    %803 = vmatprep.subr.mxu0 0.0
    %804 = vmatpush1.msra.mxu0 0.0
    %805 = vmatprep.subr.mxu0 0.0
    %806 = vmatpush1.msra.mxu0 0.0
    %807 = vmatprep.subr.mxu0 0.0
    %808 = vmatpush1.msra.mxu0 0.0
    %809 = vmatprep.subr.mxu0 0.0
    %810 = vmatpush1.msra.mxu0 0.0
    %811 = vmatprep.subr.mxu0 0.0
    %812 = vmatpush1.msra.mxu0 0.0
    %813 = vmatprep.mubr.f32.mxu0 0.0
    %814 = vmatmul.mubr.f32.gmra.mrb[0].mxu0 %v676
    %v815 = vpop.f32.mrb[0].mxu0
    %v816 = vadd.f32 0.0, %v815
    %v817 = vpop.f32.mrb[0].mxu0
    %818 = vdwg.mxu0
    %v820 = vrot.slane %v745, 4
    %v822 = vadd.f32 %v197, %v820
    %v823 = vxor.u32 %v822, 2147483648
    %v824 = vmul.f32 %v823, 1.442695
    %v825 = vpow.pop %v824
    %v826 = vadd.f32 %v825, 1.0
    %v827 = vrcp.pop %v826
    %v828 = vmul.f32 1.0, %v827
    %v830 = vrot.slane %v747, 4
    %v832 = vadd.f32 %v199, %v830
    %v833 = vxor.u32 %v832, 2147483648
    %v834 = vmul.f32 %v833, 1.442695
    %v835 = vpow.pop %v834
    %v836 = vadd.f32 %v835, 1.0
    %v837 = vrcp.pop %v836
    %v838 = vmul.f32 1.0, %v837
    %v839 = vadd.f32 %v816, %v287
    %v841 = vrot.slane %v839, 4
    %v843 = vmul.f32 %v828, %v841
    %v844 = vadd.f32 %v274, %v843
    %v845 = vtanh.pop %v844
    %v846 = vsub.f32 1.0, %v838
    %v847 = vmul.f32 %v846, %v845
    %v848 = vrot.slane %v674, 6
    %v850 = vmul.f32 %v838, %v848
    %v851 = vadd.f32 %v847, %v850
    %v853 = vrot.slane %v851, 4
    %855 = vmatprep.subr.mxu0 %v290
    %856 = vmatpush1.msra.mxu0 %v289
    %857 = vmatprep.subr.mxu0 %v293
    %858 = vmatpush1.msra.mxu0 %v292
    %859 = vmatprep.subr.mxu0 %v296
    %860 = vmatpush1.msra.mxu0 %v295
    %861 = vmatprep.subr.mxu0 %v299
    %862 = vmatpush1.msra.mxu0 %v298
    %863 = vmatprep.subr.mxu0 %v302
    %864 = vmatpush1.msra.mxu0 %v301
    %865 = vmatprep.subr.mxu0 %v305
    %866 = vmatpush1.msra.mxu0 %v304
    %867 = vmatprep.subr.mxu0 %v308
    %868 = vmatpush1.msra.mxu0 %v307
    %869 = vmatprep.subr.mxu0 %v311
    %870 = vmatpush1.msra.mxu0 %v310
    %871 = vmatprep.subr.mxu0 %v314
    %872 = vmatpush1.msra.mxu0 %v313
    %873 = vmatprep.subr.mxu0 %v317
    %874 = vmatpush1.msra.mxu0 %v316
    %875 = vmatprep.subr.mxu0 %v320
    %876 = vmatpush1.msra.mxu0 %v319
    %877 = vmatprep.subr.mxu0 %v323
    %878 = vmatpush1.msra.mxu0 %v322
    %879 = vmatprep.subr.mxu0 %v326
    %880 = vmatpush1.msra.mxu0 %v325
    %881 = vmatprep.subr.mxu0 %v329
    %882 = vmatpush1.msra.mxu0 %v328
    %883 = vmatprep.subr.mxu0 %v332
    %884 = vmatpush1.msra.mxu0 %v331
    %885 = vmatprep.subr.mxu0 %v335
    %886 = vmatpush1.msra.mxu0 %v334
    %887 = vmatprep.subr.mxu0 0.0
    %888 = vmatpush1.msra.mxu0 0.0
    %889 = vmatprep.subr.mxu0 0.0
    %890 = vmatpush1.msra.mxu0 0.0
    %891 = vmatprep.subr.mxu0 0.0
    %892 = vmatpush1.msra.mxu0 0.0
    %893 = vmatprep.subr.mxu0 0.0
    %894 = vmatpush1.msra.mxu0 0.0
    %895 = vmatprep.subr.mxu0 0.0
    %896 = vmatpush1.msra.mxu0 0.0
    %897 = vmatprep.subr.mxu0 0.0
    %898 = vmatpush1.msra.mxu0 0.0
    %899 = vmatprep.subr.mxu0 0.0
    %900 = vmatpush1.msra.mxu0 0.0
    %901 = vmatprep.subr.mxu0 0.0
    %902 = vmatpush1.msra.mxu0 0.0
    %903 = vmatprep.subr.mxu0 0.0
    %904 = vmatpush1.msra.mxu0 0.0
    %905 = vmatprep.subr.mxu0 0.0
    %906 = vmatpush1.msra.mxu0 0.0
    %907 = vmatprep.subr.mxu0 0.0
    %908 = vmatpush1.msra.mxu0 0.0
    %909 = vmatprep.subr.mxu0 0.0
    %910 = vmatpush1.msra.mxu0 0.0
    %911 = vmatprep.subr.mxu0 0.0
    %912 = vmatpush1.msra.mxu0 0.0
    %913 = vmatprep.subr.mxu0 0.0
    %914 = vmatpush1.msra.mxu0 0.0
    %915 = vmatprep.subr.mxu0 0.0
    %916 = vmatpush1.msra.mxu0 0.0
    %917 = vmatprep.subr.mxu0 0.0
    %918 = vmatpush1.msra.mxu0 0.0
    %919 = vmatprep.mubr.f32.mxu0 0.0
    %920 = vmatmul.mubr.f32.gmra.mrb[0].mxu0 %v853
    %v921 = vpop.f32.mrb[0].mxu0
    %v922 = vadd.f32 0.0, %v921
    %v923 = vpop.f32.mrb[0].mxu0
    %v924 = vadd.f32 0.0, %v923
    %925 = vdwg.mxu0
    %926 = vmatprep.subr.mxu0 0.0
    %927 = vmatpush1.msra.mxu0 %v291
    %928 = vmatprep.subr.mxu0 0.0
    %929 = vmatpush1.msra.mxu0 %v294
    %930 = vmatprep.subr.mxu0 0.0
    %931 = vmatpush1.msra.mxu0 %v297
    %932 = vmatprep.subr.mxu0 0.0
    %933 = vmatpush1.msra.mxu0 %v300
    %934 = vmatprep.subr.mxu0 0.0
    %935 = vmatpush1.msra.mxu0 %v303
    %936 = vmatprep.subr.mxu0 0.0
    %937 = vmatpush1.msra.mxu0 %v306
    %938 = vmatprep.subr.mxu0 0.0
    %939 = vmatpush1.msra.mxu0 %v309
    %940 = vmatprep.subr.mxu0 0.0
    %941 = vmatpush1.msra.mxu0 %v312
    %942 = vmatprep.subr.mxu0 0.0
    %943 = vmatpush1.msra.mxu0 %v315
    %944 = vmatprep.subr.mxu0 0.0
    %945 = vmatpush1.msra.mxu0 %v318
    %946 = vmatprep.subr.mxu0 0.0
    %947 = vmatpush1.msra.mxu0 %v321
    %948 = vmatprep.subr.mxu0 0.0
    %949 = vmatpush1.msra.mxu0 %v324
    %950 = vmatprep.subr.mxu0 0.0
    %951 = vmatpush1.msra.mxu0 %v327
    %952 = vmatprep.subr.mxu0 0.0
    %953 = vmatpush1.msra.mxu0 %v330
    %954 = vmatprep.subr.mxu0 0.0
    %955 = vmatpush1.msra.mxu0 %v333
    %956 = vmatprep.subr.mxu0 0.0
    %957 = vmatpush1.msra.mxu0 %v336
    %958 = vmatprep.subr.mxu0 0.0
    %959 = vmatpush1.msra.mxu0 0.0
    %960 = vmatprep.subr.mxu0 0.0
    %961 = vmatpush1.msra.mxu0 0.0
    %962 = vmatprep.subr.mxu0 0.0
    %963 = vmatpush1.msra.mxu0 0.0
    %964 = vmatprep.subr.mxu0 0.0
    %965 = vmatpush1.msra.mxu0 0.0
    %966 = vmatprep.subr.mxu0 0.0
    %967 = vmatpush1.msra.mxu0 0.0
    %968 = vmatprep.subr.mxu0 0.0
    %969 = vmatpush1.msra.mxu0 0.0
    %970 = vmatprep.subr.mxu0 0.0
    %971 = vmatpush1.msra.mxu0 0.0
    %972 = vmatprep.subr.mxu0 0.0
    %973 = vmatpush1.msra.mxu0 0.0
    %974 = vmatprep.subr.mxu0 0.0
    %975 = vmatpush1.msra.mxu0 0.0
    %976 = vmatprep.subr.mxu0 0.0
    %977 = vmatpush1.msra.mxu0 0.0
    %978 = vmatprep.subr.mxu0 0.0
    %979 = vmatpush1.msra.mxu0 0.0
    %980 = vmatprep.subr.mxu0 0.0
    %981 = vmatpush1.msra.mxu0 0.0
    %982 = vmatprep.subr.mxu0 0.0
    %983 = vmatpush1.msra.mxu0 0.0
    %984 = vmatprep.subr.mxu0 0.0
    %985 = vmatpush1.msra.mxu0 0.0
    %986 = vmatprep.subr.mxu0 0.0
    %987 = vmatpush1.msra.mxu0 0.0
    %988 = vmatprep.subr.mxu0 0.0
    %989 = vmatpush1.msra.mxu0 0.0
    %990 = vmatprep.mubr.f32.mxu0 0.0
    %991 = vmatmul.mubr.f32.gmra.mrb[0].mxu0 %v853
    %v992 = vpop.f32.mrb[0].mxu0
    %v993 = vadd.f32 0.0, %v992
    %v994 = vpop.f32.mrb[0].mxu0
    %995 = vdwg.mxu0
    %v997 = vrot.slane %v922, 2
    %v999 = vadd.f32 %v197, %v997
    %v1000 = vxor.u32 %v999, 2147483648
    %v1001 = vmul.f32 %v1000, 1.442695
    %v1002 = vpow.pop %v1001
    %v1003 = vadd.f32 %v1002, 1.0
    %v1004 = vrcp.pop %v1003
    %v1005 = vmul.f32 1.0, %v1004
    %v1007 = vrot.slane %v924, 2
    %v1009 = vadd.f32 %v199, %v1007
    %v1010 = vxor.u32 %v1009, 2147483648
    %v1011 = vmul.f32 %v1010, 1.442695
    %v1012 = vpow.pop %v1011
    %v1013 = vadd.f32 %v1012, 1.0
    %v1014 = vrcp.pop %v1013
    %v1015 = vmul.f32 1.0, %v1014
    %v1016 = vadd.f32 %v993, %v287
    %v1018 = vrot.slane %v1016, 2
    %v1020 = vmul.f32 %v1005, %v1018
    %v1021 = vadd.f32 %v274, %v1020
    %v1022 = vtanh.pop %v1021
    %v1023 = vsub.f32 1.0, %v1015
    %v1024 = vmul.f32 %v1023, %v1022
    %v1025 = vrot.slane %v851, 6
    %v1027 = vmul.f32 %v1015, %v1025
    %v1028 = vadd.f32 %v1024, %v1027
    %v1030 = vrot.slane %v1028, 6
    %1032 = vmatprep.subr.mxu0 %v290
    %1033 = vmatpush1.msra.mxu0 %v289
    %1034 = vmatprep.subr.mxu0 %v293
    %1035 = vmatpush1.msra.mxu0 %v292
    %1036 = vmatprep.subr.mxu0 %v296
    %1037 = vmatpush1.msra.mxu0 %v295
    %1038 = vmatprep.subr.mxu0 %v299
    %1039 = vmatpush1.msra.mxu0 %v298
    %1040 = vmatprep.subr.mxu0 %v302
    %1041 = vmatpush1.msra.mxu0 %v301
    %1042 = vmatprep.subr.mxu0 %v305
    %1043 = vmatpush1.msra.mxu0 %v304
    %1044 = vmatprep.subr.mxu0 %v308
    %1045 = vmatpush1.msra.mxu0 %v307
    %1046 = vmatprep.subr.mxu0 %v311
    %1047 = vmatpush1.msra.mxu0 %v310
    %1048 = vmatprep.subr.mxu0 %v314
    %1049 = vmatpush1.msra.mxu0 %v313
    %1050 = vmatprep.subr.mxu0 %v317
    %1051 = vmatpush1.msra.mxu0 %v316
    %1052 = vmatprep.subr.mxu0 %v320
    %1053 = vmatpush1.msra.mxu0 %v319
    %1054 = vmatprep.subr.mxu0 %v323
    %1055 = vmatpush1.msra.mxu0 %v322
    %1056 = vmatprep.subr.mxu0 %v326
    %1057 = vmatpush1.msra.mxu0 %v325
    %1058 = vmatprep.subr.mxu0 %v329
    %1059 = vmatpush1.msra.mxu0 %v328
    %1060 = vmatprep.subr.mxu0 %v332
    %1061 = vmatpush1.msra.mxu0 %v331
    %1062 = vmatprep.subr.mxu0 %v335
    %1063 = vmatpush1.msra.mxu0 %v334
    %1064 = vmatprep.subr.mxu0 0.0
    %1065 = vmatpush1.msra.mxu0 0.0
    %1066 = vmatprep.subr.mxu0 0.0
    %1067 = vmatpush1.msra.mxu0 0.0
    %1068 = vmatprep.subr.mxu0 0.0
    %1069 = vmatpush1.msra.mxu0 0.0
    %1070 = vmatprep.subr.mxu0 0.0
    %1071 = vmatpush1.msra.mxu0 0.0
    %1072 = vmatprep.subr.mxu0 0.0
    %1073 = vmatpush1.msra.mxu0 0.0
    %1074 = vmatprep.subr.mxu0 0.0
    %1075 = vmatpush1.msra.mxu0 0.0
    %1076 = vmatprep.subr.mxu0 0.0
    %1077 = vmatpush1.msra.mxu0 0.0
    %1078 = vmatprep.subr.mxu0 0.0
    %1079 = vmatpush1.msra.mxu0 0.0
    %1080 = vmatprep.subr.mxu0 0.0
    %1081 = vmatpush1.msra.mxu0 0.0
    %1082 = vmatprep.subr.mxu0 0.0
    %1083 = vmatpush1.msra.mxu0 0.0
    %1084 = vmatprep.subr.mxu0 0.0
    %1085 = vmatpush1.msra.mxu0 0.0
    %1086 = vmatprep.subr.mxu0 0.0
    %1087 = vmatpush1.msra.mxu0 0.0
    %1088 = vmatprep.subr.mxu0 0.0
    %1089 = vmatpush1.msra.mxu0 0.0
    %1090 = vmatprep.subr.mxu0 0.0
    %1091 = vmatpush1.msra.mxu0 0.0
    %1092 = vmatprep.subr.mxu0 0.0
    %1093 = vmatpush1.msra.mxu0 0.0
    %1094 = vmatprep.subr.mxu0 0.0
    %1095 = vmatpush1.msra.mxu0 0.0
    %1096 = vmatprep.mubr.f32.mxu0 0.0
    %1097 = vmatmul.mubr.f32.gmra.mrb[0].mxu0 %v1030
    %v1098 = vpop.f32.mrb[0].mxu0
    %v1099 = vadd.f32 0.0, %v1098
    %v1100 = vpop.f32.mrb[0].mxu0
    %v1101 = vadd.f32 0.0, %v1100
    %1102 = vdwg.mxu0
    %1103 = vmatprep.subr.mxu0 0.0
    %1104 = vmatpush1.msra.mxu0 %v291
    %1105 = vmatprep.subr.mxu0 0.0
    %1106 = vmatpush1.msra.mxu0 %v294
    %1107 = vmatprep.subr.mxu0 0.0
    %1108 = vmatpush1.msra.mxu0 %v297
    %1109 = vmatprep.subr.mxu0 0.0
    %1110 = vmatpush1.msra.mxu0 %v300
    %1111 = vmatprep.subr.mxu0 0.0
    %1112 = vmatpush1.msra.mxu0 %v303
    %1113 = vmatprep.subr.mxu0 0.0
    %1114 = vmatpush1.msra.mxu0 %v306
    %1115 = vmatprep.subr.mxu0 0.0
    %1116 = vmatpush1.msra.mxu0 %v309
    %1117 = vmatprep.subr.mxu0 0.0
    %1118 = vmatpush1.msra.mxu0 %v312
    %1119 = vmatprep.subr.mxu0 0.0
    %1120 = vmatpush1.msra.mxu0 %v315
    %1121 = vmatprep.subr.mxu0 0.0
    %1122 = vmatpush1.msra.mxu0 %v318
    %1123 = vmatprep.subr.mxu0 0.0
    %1124 = vmatpush1.msra.mxu0 %v321
    %1125 = vmatprep.subr.mxu0 0.0
    %1126 = vmatpush1.msra.mxu0 %v324
    %1127 = vmatprep.subr.mxu0 0.0
    %1128 = vmatpush1.msra.mxu0 %v327
    %1129 = vmatprep.subr.mxu0 0.0
    %1130 = vmatpush1.msra.mxu0 %v330
    %1131 = vmatprep.subr.mxu0 0.0
    %1132 = vmatpush1.msra.mxu0 %v333
    %1133 = vmatprep.subr.mxu0 0.0
    %1134 = vmatpush1.msra.mxu0 %v336
    %1135 = vmatprep.subr.mxu0 0.0
    %1136 = vmatpush1.msra.mxu0 0.0
    %1137 = vmatprep.subr.mxu0 0.0
    %1138 = vmatpush1.msra.mxu0 0.0
    %1139 = vmatprep.subr.mxu0 0.0
    %1140 = vmatpush1.msra.mxu0 0.0
    %1141 = vmatprep.subr.mxu0 0.0
    %1142 = vmatpush1.msra.mxu0 0.0
    %1143 = vmatprep.subr.mxu0 0.0
    %1144 = vmatpush1.msra.mxu0 0.0
    %1145 = vmatprep.subr.mxu0 0.0
    %1146 = vmatpush1.msra.mxu0 0.0
    %1147 = vmatprep.subr.mxu0 0.0
    %1148 = vmatpush1.msra.mxu0 0.0
    %1149 = vmatprep.subr.mxu0 0.0
    %1150 = vmatpush1.msra.mxu0 0.0
    %1151 = vmatprep.subr.mxu0 0.0
    %1152 = vmatpush1.msra.mxu0 0.0
    %1153 = vmatprep.subr.mxu0 0.0
    %1154 = vmatpush1.msra.mxu0 0.0
    %1155 = vmatprep.subr.mxu0 0.0
    %1156 = vmatpush1.msra.mxu0 0.0
    %1157 = vmatprep.subr.mxu0 0.0
    %1158 = vmatpush1.msra.mxu0 0.0
    %1159 = vmatprep.subr.mxu0 0.0
    %1160 = vmatpush1.msra.mxu0 0.0
    %1161 = vmatprep.subr.mxu0 0.0
    %1162 = vmatpush1.msra.mxu0 0.0
    %1163 = vmatprep.subr.mxu0 0.0
    %1164 = vmatpush1.msra.mxu0 0.0
    %1165 = vmatprep.subr.mxu0 0.0
    %1166 = vmatpush1.msra.mxu0 0.0
    %1167 = vmatprep.mubr.f32.mxu0 0.0
    %1168 = vmatmul.mubr.f32.gmra.mrb[0].mxu0 %v1030
    %v1169 = vpop.f32.mrb[0].mxu0
    %v1170 = vadd.f32 0.0, %v1169
    %v1171 = vpop.f32.mrb[0].mxu0
    %1172 = vdwg.mxu0
    %v1173 = vadd.f32 %v203, %v1099
    %v1174 = vxor.u32 %v1173, 2147483648
    %v1175 = vmul.f32 %v1174, 1.442695
    %v1176 = vpow.pop %v1175
    %v1177 = vadd.f32 %v1176, 1.0
    %v1178 = vrcp.pop %v1177
    %v1179 = vmul.f32 1.0, %v1178
    %v1180 = vadd.f32 %v205, %v1101
    %v1181 = vxor.u32 %v1180, 2147483648
    %v1182 = vmul.f32 %v1181, 1.442695
    %v1183 = vpow.pop %v1182
    %v1184 = vadd.f32 %v1183, 1.0
    %v1185 = vrcp.pop %v1184
    %v1186 = vmul.f32 1.0, %v1185
    %v1187 = vadd.f32 %v1170, %v287
    %v1188 = vmul.f32 %v1179, %v1187
    %v1189 = vadd.f32 %v279, %v1188
    %v1190 = vtanh.pop %v1189
    %v1191 = vsub.f32 1.0, %v1186
    %v1192 = vmul.f32 %v1191, %v1190
    %v1193 = vmul.f32 %v1186, %v1030
    %v1194 = vadd.f32 %v1192, %v1193
    %1195 = vmatprep.subr.mxu0 %v290
    %1196 = vmatpush1.msra.mxu0 %v289
    %1197 = vmatprep.subr.mxu0 %v293
    %1198 = vmatpush1.msra.mxu0 %v292
    %1199 = vmatprep.subr.mxu0 %v296
    %1200 = vmatpush1.msra.mxu0 %v295
    %1201 = vmatprep.subr.mxu0 %v299
    %1202 = vmatpush1.msra.mxu0 %v298
    %1203 = vmatprep.subr.mxu0 %v302
    %1204 = vmatpush1.msra.mxu0 %v301
    %1205 = vmatprep.subr.mxu0 %v305
    %1206 = vmatpush1.msra.mxu0 %v304
    %1207 = vmatprep.subr.mxu0 %v308
    %1208 = vmatpush1.msra.mxu0 %v307
    %1209 = vmatprep.subr.mxu0 %v311
    %1210 = vmatpush1.msra.mxu0 %v310
    %1211 = vmatprep.subr.mxu0 %v314
    %1212 = vmatpush1.msra.mxu0 %v313
    %1213 = vmatprep.subr.mxu0 %v317
    %1214 = vmatpush1.msra.mxu0 %v316
    %1215 = vmatprep.subr.mxu0 %v320
    %1216 = vmatpush1.msra.mxu0 %v319
    %1217 = vmatprep.subr.mxu0 %v323
    %1218 = vmatpush1.msra.mxu0 %v322
    %1219 = vmatprep.subr.mxu0 %v326
    %1220 = vmatpush1.msra.mxu0 %v325
    %1221 = vmatprep.subr.mxu0 %v329
    %1222 = vmatpush1.msra.mxu0 %v328
    %1223 = vmatprep.subr.mxu0 %v332
    %1224 = vmatpush1.msra.mxu0 %v331
    %1225 = vmatprep.subr.mxu0 %v335
    %1226 = vmatpush1.msra.mxu0 %v334
    %1227 = vmatprep.subr.mxu0 0.0
    %1228 = vmatpush1.msra.mxu0 0.0
    %1229 = vmatprep.subr.mxu0 0.0
    %1230 = vmatpush1.msra.mxu0 0.0
    %1231 = vmatprep.subr.mxu0 0.0
    %1232 = vmatpush1.msra.mxu0 0.0
    %1233 = vmatprep.subr.mxu0 0.0
    %1234 = vmatpush1.msra.mxu0 0.0
    %1235 = vmatprep.subr.mxu0 0.0
    %1236 = vmatpush1.msra.mxu0 0.0
    %1237 = vmatprep.subr.mxu0 0.0
    %1238 = vmatpush1.msra.mxu0 0.0
    %1239 = vmatprep.subr.mxu0 0.0
    %1240 = vmatpush1.msra.mxu0 0.0
    %1241 = vmatprep.subr.mxu0 0.0
    %1242 = vmatpush1.msra.mxu0 0.0
    %1243 = vmatprep.subr.mxu0 0.0
    %1244 = vmatpush1.msra.mxu0 0.0
    %1245 = vmatprep.subr.mxu0 0.0
    %1246 = vmatpush1.msra.mxu0 0.0
    %1247 = vmatprep.subr.mxu0 0.0
    %1248 = vmatpush1.msra.mxu0 0.0
    %1249 = vmatprep.subr.mxu0 0.0
    %1250 = vmatpush1.msra.mxu0 0.0
    %1251 = vmatprep.subr.mxu0 0.0
    %1252 = vmatpush1.msra.mxu0 0.0
    %1253 = vmatprep.subr.mxu0 0.0
    %1254 = vmatpush1.msra.mxu0 0.0
    %1255 = vmatprep.subr.mxu0 0.0
    %1256 = vmatpush1.msra.mxu0 0.0
    %1257 = vmatprep.subr.mxu0 0.0
    %1258 = vmatpush1.msra.mxu0 0.0
    %1259 = vmatprep.mubr.f32.mxu0 0.0
    %1260 = vmatmul.mubr.f32.gmra.mrb[0].mxu0 %v1194
    %v1261 = vpop.f32.mrb[0].mxu0
    %v1262 = vadd.f32 0.0, %v1261
    %v1263 = vpop.f32.mrb[0].mxu0
    %v1264 = vadd.f32 0.0, %v1263
    %1265 = vdwg.mxu0
    %1266 = vmatprep.subr.mxu0 0.0
    %1267 = vmatpush1.msra.mxu0 %v291
    %1268 = vmatprep.subr.mxu0 0.0
    %1269 = vmatpush1.msra.mxu0 %v294
    %1270 = vmatprep.subr.mxu0 0.0
    %1271 = vmatpush1.msra.mxu0 %v297
    %1272 = vmatprep.subr.mxu0 0.0
    %1273 = vmatpush1.msra.mxu0 %v300
    %1274 = vmatprep.subr.mxu0 0.0
    %1275 = vmatpush1.msra.mxu0 %v303
    %1276 = vmatprep.subr.mxu0 0.0
    %1277 = vmatpush1.msra.mxu0 %v306
    %1278 = vmatprep.subr.mxu0 0.0
    %1279 = vmatpush1.msra.mxu0 %v309
    %1280 = vmatprep.subr.mxu0 0.0
    %1281 = vmatpush1.msra.mxu0 %v312
    %1282 = vmatprep.subr.mxu0 0.0
    %1283 = vmatpush1.msra.mxu0 %v315
    %1284 = vmatprep.subr.mxu0 0.0
    %1285 = vmatpush1.msra.mxu0 %v318
    %1286 = vmatprep.subr.mxu0 0.0
    %1287 = vmatpush1.msra.mxu0 %v321
    %1288 = vmatprep.subr.mxu0 0.0
    %1289 = vmatpush1.msra.mxu0 %v324
    %1290 = vmatprep.subr.mxu0 0.0
    %1291 = vmatpush1.msra.mxu0 %v327
    %1292 = vmatprep.subr.mxu0 0.0
    %1293 = vmatpush1.msra.mxu0 %v330
    %1294 = vmatprep.subr.mxu0 0.0
    %1295 = vmatpush1.msra.mxu0 %v333
    %1296 = vmatprep.subr.mxu0 0.0
    %1297 = vmatpush1.msra.mxu0 %v336
    %1298 = vmatprep.subr.mxu0 0.0
    %1299 = vmatpush1.msra.mxu0 0.0
    %1300 = vmatprep.subr.mxu0 0.0
    %1301 = vmatpush1.msra.mxu0 0.0
    %1302 = vmatprep.subr.mxu0 0.0
    %1303 = vmatpush1.msra.mxu0 0.0
    %1304 = vmatprep.subr.mxu0 0.0
    %1305 = vmatpush1.msra.mxu0 0.0
    %1306 = vmatprep.subr.mxu0 0.0
    %1307 = vmatpush1.msra.mxu0 0.0
    %1308 = vmatprep.subr.mxu0 0.0
    %1309 = vmatpush1.msra.mxu0 0.0
    %1310 = vmatprep.subr.mxu0 0.0
    %1311 = vmatpush1.msra.mxu0 0.0
    %1312 = vmatprep.subr.mxu0 0.0
    %1313 = vmatpush1.msra.mxu0 0.0
    %1314 = vmatprep.subr.mxu0 0.0
    %1315 = vmatpush1.msra.mxu0 0.0
    %1316 = vmatprep.subr.mxu0 0.0
    %1317 = vmatpush1.msra.mxu0 0.0
    %1318 = vmatprep.subr.mxu0 0.0
    %1319 = vmatpush1.msra.mxu0 0.0
    %1320 = vmatprep.subr.mxu0 0.0
    %1321 = vmatpush1.msra.mxu0 0.0
    %1322 = vmatprep.subr.mxu0 0.0
    %1323 = vmatpush1.msra.mxu0 0.0
    %1324 = vmatprep.subr.mxu0 0.0
    %1325 = vmatpush1.msra.mxu0 0.0
    %1326 = vmatprep.subr.mxu0 0.0
    %1327 = vmatpush1.msra.mxu0 0.0
    %1328 = vmatprep.subr.mxu0 0.0
    %1329 = vmatpush1.msra.mxu0 0.0
    %1330 = vmatprep.mubr.f32.mxu0 0.0
    %1331 = vmatmul.mubr.f32.gmra.mrb[0].mxu0 %v1194
    %v1332 = vpop.f32.mrb[0].mxu0
    %v1333 = vadd.f32 0.0, %v1332
    %v1334 = vpop.f32.mrb[0].mxu0
    %1335 = vdwg.mxu0
    %v1337 = vrot.slane %v1262, 6
    %v1339 = vadd.f32 %v203, %v1337
    %v1340 = vxor.u32 %v1339, 2147483648
    %v1341 = vmul.f32 %v1340, 1.442695
    %v1342 = vpow.pop %v1341
    %v1343 = vadd.f32 %v1342, 1.0
    %v1344 = vrcp.pop %v1343
    %v1345 = vmul.f32 1.0, %v1344
    %v1347 = vrot.slane %v1264, 6
    %v1349 = vadd.f32 %v205, %v1347
    %v1350 = vxor.u32 %v1349, 2147483648
    %v1351 = vmul.f32 %v1350, 1.442695
    %v1352 = vpow.pop %v1351
    %v1353 = vadd.f32 %v1352, 1.0
    %v1354 = vrcp.pop %v1353
    %v1355 = vmul.f32 1.0, %v1354
    %v1356 = vadd.f32 %v1333, %v287
    %v1358 = vrot.slane %v1356, 6
    %v1360 = vmul.f32 %v1345, %v1358
    %v1361 = vadd.f32 %v279, %v1360
    %v1362 = vtanh.pop %v1361
    %v1363 = vsub.f32 1.0, %v1355
    %v1364 = vmul.f32 %v1363, %v1362
    %v1366 = vrot.slane %v1194, 6
    %v1368 = vmul.f32 %v1355, %v1366
    %v1369 = vadd.f32 %v1364, %v1368
    %v1371 = vrot.slane %v1369, 2
    %1373 = vmatprep.subr.mxu0 %v290
    %1374 = vmatpush1.msra.mxu0 %v289
    %1375 = vmatprep.subr.mxu0 %v293
    %1376 = vmatpush1.msra.mxu0 %v292
    %1377 = vmatprep.subr.mxu0 %v296
    %1378 = vmatpush1.msra.mxu0 %v295
    %1379 = vmatprep.subr.mxu0 %v299
    %1380 = vmatpush1.msra.mxu0 %v298
    %1381 = vmatprep.subr.mxu0 %v302
    %1382 = vmatpush1.msra.mxu0 %v301
    %1383 = vmatprep.subr.mxu0 %v305
    %1384 = vmatpush1.msra.mxu0 %v304
    %1385 = vmatprep.subr.mxu0 %v308
    %1386 = vmatpush1.msra.mxu0 %v307
    %1387 = vmatprep.subr.mxu0 %v311
    %1388 = vmatpush1.msra.mxu0 %v310
    %1389 = vmatprep.subr.mxu0 %v314
    %1390 = vmatpush1.msra.mxu0 %v313
    %1391 = vmatprep.subr.mxu0 %v317
    %1392 = vmatpush1.msra.mxu0 %v316
    %1393 = vmatprep.subr.mxu0 %v320
    %1394 = vmatpush1.msra.mxu0 %v319
    %1395 = vmatprep.subr.mxu0 %v323
    %1396 = vmatpush1.msra.mxu0 %v322
    %1397 = vmatprep.subr.mxu0 %v326
    %1398 = vmatpush1.msra.mxu0 %v325
    %1399 = vmatprep.subr.mxu0 %v329
    %1400 = vmatpush1.msra.mxu0 %v328
    %1401 = vmatprep.subr.mxu0 %v332
    %1402 = vmatpush1.msra.mxu0 %v331
    %1403 = vmatprep.subr.mxu0 %v335
    %1404 = vmatpush1.msra.mxu0 %v334
    %1405 = vmatprep.subr.mxu0 0.0
    %1406 = vmatpush1.msra.mxu0 0.0
    %1407 = vmatprep.subr.mxu0 0.0
    %1408 = vmatpush1.msra.mxu0 0.0
    %1409 = vmatprep.subr.mxu0 0.0
    %1410 = vmatpush1.msra.mxu0 0.0
    %1411 = vmatprep.subr.mxu0 0.0
    %1412 = vmatpush1.msra.mxu0 0.0
    %1413 = vmatprep.subr.mxu0 0.0
    %1414 = vmatpush1.msra.mxu0 0.0
    %1415 = vmatprep.subr.mxu0 0.0
    %1416 = vmatpush1.msra.mxu0 0.0
    %1417 = vmatprep.subr.mxu0 0.0
    %1418 = vmatpush1.msra.mxu0 0.0
    %1419 = vmatprep.subr.mxu0 0.0
    %1420 = vmatpush1.msra.mxu0 0.0
    %1421 = vmatprep.subr.mxu0 0.0
    %1422 = vmatpush1.msra.mxu0 0.0
    %1423 = vmatprep.subr.mxu0 0.0
    %1424 = vmatpush1.msra.mxu0 0.0
    %1425 = vmatprep.subr.mxu0 0.0
    %1426 = vmatpush1.msra.mxu0 0.0
    %1427 = vmatprep.subr.mxu0 0.0
    %1428 = vmatpush1.msra.mxu0 0.0
    %1429 = vmatprep.subr.mxu0 0.0
    %1430 = vmatpush1.msra.mxu0 0.0
    %1431 = vmatprep.subr.mxu0 0.0
    %1432 = vmatpush1.msra.mxu0 0.0
    %1433 = vmatprep.subr.mxu0 0.0
    %1434 = vmatpush1.msra.mxu0 0.0
    %1435 = vmatprep.subr.mxu0 0.0
    %1436 = vmatpush1.msra.mxu0 0.0
    %1437 = vmatprep.mubr.f32.mxu0 0.0
    %1438 = vmatmul.mubr.f32.gmra.mrb[0].mxu0 %v1371
    %v1439 = vpop.f32.mrb[0].mxu0
    %v1440 = vadd.f32 0.0, %v1439
    %v1441 = vpop.f32.mrb[0].mxu0
    %v1442 = vadd.f32 0.0, %v1441
    %1443 = vdwg.mxu0
    %1444 = vmatprep.subr.mxu0 0.0
    %1445 = vmatpush1.msra.mxu0 %v291
    %1446 = vmatprep.subr.mxu0 0.0
    %1447 = vmatpush1.msra.mxu0 %v294
    %1448 = vmatprep.subr.mxu0 0.0
    %1449 = vmatpush1.msra.mxu0 %v297
    %1450 = vmatprep.subr.mxu0 0.0
    %1451 = vmatpush1.msra.mxu0 %v300
    %1452 = vmatprep.subr.mxu0 0.0
    %1453 = vmatpush1.msra.mxu0 %v303
    %1454 = vmatprep.subr.mxu0 0.0
    %1455 = vmatpush1.msra.mxu0 %v306
    %1456 = vmatprep.subr.mxu0 0.0
    %1457 = vmatpush1.msra.mxu0 %v309
    %1458 = vmatprep.subr.mxu0 0.0
    %1459 = vmatpush1.msra.mxu0 %v312
    %1460 = vmatprep.subr.mxu0 0.0
    %1461 = vmatpush1.msra.mxu0 %v315
    %1462 = vmatprep.subr.mxu0 0.0
    %1463 = vmatpush1.msra.mxu0 %v318
    %1464 = vmatprep.subr.mxu0 0.0
    %1465 = vmatpush1.msra.mxu0 %v321
    %1466 = vmatprep.subr.mxu0 0.0
    %1467 = vmatpush1.msra.mxu0 %v324
    %1468 = vmatprep.subr.mxu0 0.0
    %1469 = vmatpush1.msra.mxu0 %v327
    %1470 = vmatprep.subr.mxu0 0.0
    %1471 = vmatpush1.msra.mxu0 %v330
    %1472 = vmatprep.subr.mxu0 0.0
    %1473 = vmatpush1.msra.mxu0 %v333
    %1474 = vmatprep.subr.mxu0 0.0
    %1475 = vmatpush1.msra.mxu0 %v336
    %1476 = vmatprep.subr.mxu0 0.0
    %1477 = vmatpush1.msra.mxu0 0.0
    %1478 = vmatprep.subr.mxu0 0.0
    %1479 = vmatpush1.msra.mxu0 0.0
    %1480 = vmatprep.subr.mxu0 0.0
    %1481 = vmatpush1.msra.mxu0 0.0
    %1482 = vmatprep.subr.mxu0 0.0
    %1483 = vmatpush1.msra.mxu0 0.0
    %1484 = vmatprep.subr.mxu0 0.0
    %1485 = vmatpush1.msra.mxu0 0.0
    %1486 = vmatprep.subr.mxu0 0.0
    %1487 = vmatpush1.msra.mxu0 0.0
    %1488 = vmatprep.subr.mxu0 0.0
    %1489 = vmatpush1.msra.mxu0 0.0
    %1490 = vmatprep.subr.mxu0 0.0
    %1491 = vmatpush1.msra.mxu0 0.0
    %1492 = vmatprep.subr.mxu0 0.0
    %1493 = vmatpush1.msra.mxu0 0.0
    %1494 = vmatprep.subr.mxu0 0.0
    %1495 = vmatpush1.msra.mxu0 0.0
    %1496 = vmatprep.subr.mxu0 0.0
    %1497 = vmatpush1.msra.mxu0 0.0
    %1498 = vmatprep.subr.mxu0 0.0
    %1499 = vmatpush1.msra.mxu0 0.0
    %1500 = vmatprep.subr.mxu0 0.0
    %1501 = vmatpush1.msra.mxu0 0.0
    %1502 = vmatprep.subr.mxu0 0.0
    %1503 = vmatpush1.msra.mxu0 0.0
    %1504 = vmatprep.subr.mxu0 0.0
    %1505 = vmatpush1.msra.mxu0 0.0
    %1506 = vmatprep.subr.mxu0 0.0
    %1507 = vmatpush1.msra.mxu0 0.0
    %1508 = vmatprep.mubr.f32.mxu0 0.0
    %1509 = vmatmul.mubr.f32.gmra.mrb[0].mxu0 %v1371
    %v1510 = vpop.f32.mrb[0].mxu0
    %v1511 = vadd.f32 0.0, %v1510
    %v1512 = vpop.f32.mrb[0].mxu0
    %1513 = vdwg.mxu0
    %v1515 = vrot.slane %v1440, 4
    %v1517 = vadd.f32 %v203, %v1515
    %v1518 = vxor.u32 %v1517, 2147483648
    %v1519 = vmul.f32 %v1518, 1.442695
    %v1520 = vpow.pop %v1519
    %v1521 = vadd.f32 %v1520, 1.0
    %v1522 = vrcp.pop %v1521
    %v1523 = vmul.f32 1.0, %v1522
    %v1525 = vrot.slane %v1442, 4
    %v1527 = vadd.f32 %v205, %v1525
    %v1528 = vxor.u32 %v1527, 2147483648
    %v1529 = vmul.f32 %v1528, 1.442695
    %v1530 = vpow.pop %v1529
    %v1531 = vadd.f32 %v1530, 1.0
    %v1532 = vrcp.pop %v1531
    %v1533 = vmul.f32 1.0, %v1532
    %v1534 = vadd.f32 %v1511, %v287
    %v1536 = vrot.slane %v1534, 4
    %v1538 = vmul.f32 %v1523, %v1536
    %v1539 = vadd.f32 %v279, %v1538
    %v1540 = vtanh.pop %v1539
    %v1541 = vsub.f32 1.0, %v1533
    %v1542 = vmul.f32 %v1541, %v1540
    %v1543 = vrot.slane %v1369, 6
    %v1545 = vmul.f32 %v1533, %v1543
    %v1546 = vadd.f32 %v1542, %v1545
    %v1548 = vrot.slane %v1546, 4
    %1550 = vmatprep.subr.mxu0 %v290
    %1551 = vmatpush1.msra.mxu0 %v289
    %1552 = vmatprep.subr.mxu0 %v293
    %1553 = vmatpush1.msra.mxu0 %v292
    %1554 = vmatprep.subr.mxu0 %v296
    %1555 = vmatpush1.msra.mxu0 %v295
    %1556 = vmatprep.subr.mxu0 %v299
    %1557 = vmatpush1.msra.mxu0 %v298
    %1558 = vmatprep.subr.mxu0 %v302
    %1559 = vmatpush1.msra.mxu0 %v301
    %1560 = vmatprep.subr.mxu0 %v305
    %1561 = vmatpush1.msra.mxu0 %v304
    %1562 = vmatprep.subr.mxu0 %v308
    %1563 = vmatpush1.msra.mxu0 %v307
    %1564 = vmatprep.subr.mxu0 %v311
    %1565 = vmatpush1.msra.mxu0 %v310
    %1566 = vmatprep.subr.mxu0 %v314
    %1567 = vmatpush1.msra.mxu0 %v313
    %1568 = vmatprep.subr.mxu0 %v317
    %1569 = vmatpush1.msra.mxu0 %v316
    %1570 = vmatprep.subr.mxu0 %v320
    %1571 = vmatpush1.msra.mxu0 %v319
    %1572 = vmatprep.subr.mxu0 %v323
    %1573 = vmatpush1.msra.mxu0 %v322
    %1574 = vmatprep.subr.mxu0 %v326
    %1575 = vmatpush1.msra.mxu0 %v325
    %1576 = vmatprep.subr.mxu0 %v329
    %1577 = vmatpush1.msra.mxu0 %v328
    %1578 = vmatprep.subr.mxu0 %v332
    %1579 = vmatpush1.msra.mxu0 %v331
    %1580 = vmatprep.subr.mxu0 %v335
    %1581 = vmatpush1.msra.mxu0 %v334
    %1582 = vmatprep.subr.mxu0 0.0
    %1583 = vmatpush1.msra.mxu0 0.0
    %1584 = vmatprep.subr.mxu0 0.0
    %1585 = vmatpush1.msra.mxu0 0.0
    %1586 = vmatprep.subr.mxu0 0.0
    %1587 = vmatpush1.msra.mxu0 0.0
    %1588 = vmatprep.subr.mxu0 0.0
    %1589 = vmatpush1.msra.mxu0 0.0
    %1590 = vmatprep.subr.mxu0 0.0
    %1591 = vmatpush1.msra.mxu0 0.0
    %1592 = vmatprep.subr.mxu0 0.0
    %1593 = vmatpush1.msra.mxu0 0.0
    %1594 = vmatprep.subr.mxu0 0.0
    %1595 = vmatpush1.msra.mxu0 0.0
    %1596 = vmatprep.subr.mxu0 0.0
    %1597 = vmatpush1.msra.mxu0 0.0
    %1598 = vmatprep.subr.mxu0 0.0
    %1599 = vmatpush1.msra.mxu0 0.0
    %1600 = vmatprep.subr.mxu0 0.0
    %1601 = vmatpush1.msra.mxu0 0.0
    %1602 = vmatprep.subr.mxu0 0.0
    %1603 = vmatpush1.msra.mxu0 0.0
    %1604 = vmatprep.subr.mxu0 0.0
    %1605 = vmatpush1.msra.mxu0 0.0
    %1606 = vmatprep.subr.mxu0 0.0
    %1607 = vmatpush1.msra.mxu0 0.0
    %1608 = vmatprep.subr.mxu0 0.0
    %1609 = vmatpush1.msra.mxu0 0.0
    %1610 = vmatprep.subr.mxu0 0.0
    %1611 = vmatpush1.msra.mxu0 0.0
    %1612 = vmatprep.subr.mxu0 0.0
    %1613 = vmatpush1.msra.mxu0 0.0
    %1614 = vmatprep.mubr.f32.mxu0 0.0
    %1615 = vmatmul.mubr.f32.gmra.mrb[0].mxu0 %v1548
    %v1616 = vpop.f32.mrb[0].mxu0
    %v1617 = vadd.f32 0.0, %v1616
    %v1618 = vpop.f32.mrb[0].mxu0
    %v1619 = vadd.f32 0.0, %v1618
    %1620 = vdwg.mxu0
    %1621 = vmatprep.subr.mxu0 0.0
    %1622 = vmatpush1.msra.mxu0 %v291
    %1623 = vmatprep.subr.mxu0 0.0
    %1624 = vmatpush1.msra.mxu0 %v294
    %1625 = vmatprep.subr.mxu0 0.0
    %1626 = vmatpush1.msra.mxu0 %v297
    %1627 = vmatprep.subr.mxu0 0.0
    %1628 = vmatpush1.msra.mxu0 %v300
    %1629 = vmatprep.subr.mxu0 0.0
    %1630 = vmatpush1.msra.mxu0 %v303
    %1631 = vmatprep.subr.mxu0 0.0
    %1632 = vmatpush1.msra.mxu0 %v306
    %1633 = vmatprep.subr.mxu0 0.0
    %1634 = vmatpush1.msra.mxu0 %v309
    %1635 = vmatprep.subr.mxu0 0.0
    %1636 = vmatpush1.msra.mxu0 %v312
    %1637 = vmatprep.subr.mxu0 0.0
    %1638 = vmatpush1.msra.mxu0 %v315
    %1639 = vmatprep.subr.mxu0 0.0
    %1640 = vmatpush1.msra.mxu0 %v318
    %1641 = vmatprep.subr.mxu0 0.0
    %1642 = vmatpush1.msra.mxu0 %v321
    %1643 = vmatprep.subr.mxu0 0.0
    %1644 = vmatpush1.msra.mxu0 %v324
    %1645 = vmatprep.subr.mxu0 0.0
    %1646 = vmatpush1.msra.mxu0 %v327
    %1647 = vmatprep.subr.mxu0 0.0
    %1648 = vmatpush1.msra.mxu0 %v330
    %1649 = vmatprep.subr.mxu0 0.0
    %1650 = vmatpush1.msra.mxu0 %v333
    %1651 = vmatprep.subr.mxu0 0.0
    %1652 = vmatpush1.msra.mxu0 %v336
    %1653 = vmatprep.subr.mxu0 0.0
    %1654 = vmatpush1.msra.mxu0 0.0
    %1655 = vmatprep.subr.mxu0 0.0
    %1656 = vmatpush1.msra.mxu0 0.0
    %1657 = vmatprep.subr.mxu0 0.0
    %1658 = vmatpush1.msra.mxu0 0.0
    %1659 = vmatprep.subr.mxu0 0.0
    %1660 = vmatpush1.msra.mxu0 0.0
    %1661 = vmatprep.subr.mxu0 0.0
    %1662 = vmatpush1.msra.mxu0 0.0
    %1663 = vmatprep.subr.mxu0 0.0
    %1664 = vmatpush1.msra.mxu0 0.0
    %1665 = vmatprep.subr.mxu0 0.0
    %1666 = vmatpush1.msra.mxu0 0.0
    %1667 = vmatprep.subr.mxu0 0.0
    %1668 = vmatpush1.msra.mxu0 0.0
    %1669 = vmatprep.subr.mxu0 0.0
    %1670 = vmatpush1.msra.mxu0 0.0
    %1671 = vmatprep.subr.mxu0 0.0
    %1672 = vmatpush1.msra.mxu0 0.0
    %1673 = vmatprep.subr.mxu0 0.0
    %1674 = vmatpush1.msra.mxu0 0.0
    %1675 = vmatprep.subr.mxu0 0.0
    %1676 = vmatpush1.msra.mxu0 0.0
    %1677 = vmatprep.subr.mxu0 0.0
    %1678 = vmatpush1.msra.mxu0 0.0
    %1679 = vmatprep.subr.mxu0 0.0
    %1680 = vmatpush1.msra.mxu0 0.0
    %1681 = vmatprep.subr.mxu0 0.0
    %1682 = vmatpush1.msra.mxu0 0.0
    %1683 = vmatprep.subr.mxu0 0.0
    %1684 = vmatpush1.msra.mxu0 0.0
    %1685 = vmatprep.mubr.f32.mxu0 0.0
    %1686 = vmatmul.mubr.f32.gmra.mrb[0].mxu0 %v1548
    %v1687 = vpop.f32.mrb[0].mxu0
    %v1688 = vadd.f32 0.0, %v1687
    %v1689 = vpop.f32.mrb[0].mxu0
    %1690 = vdwg.mxu0
    %v1692 = vrot.slane %v1617, 2
    %v1694 = vadd.f32 %v203, %v1692
    %v1695 = vxor.u32 %v1694, 2147483648
    %v1696 = vmul.f32 %v1695, 1.442695
    %v1697 = vpow.pop %v1696
    %v1698 = vadd.f32 %v1697, 1.0
    %v1699 = vrcp.pop %v1698
    %v1700 = vmul.f32 1.0, %v1699
    %v1702 = vrot.slane %v1619, 2
    %v1704 = vadd.f32 %v205, %v1702
    %v1705 = vxor.u32 %v1704, 2147483648
    %v1706 = vmul.f32 %v1705, 1.442695
    %v1707 = vpow.pop %v1706
    %v1708 = vadd.f32 %v1707, 1.0
    %v1709 = vrcp.pop %v1708
    %v1710 = vmul.f32 1.0, %v1709
    %v1711 = vadd.f32 %v1688, %v287
    %v1713 = vrot.slane %v1711, 2
    %v1715 = vmul.f32 %v1700, %v1713
    %v1716 = vadd.f32 %v279, %v1715
    %v1717 = vtanh.pop %v1716
    %v1718 = vsub.f32 1.0, %v1710
    %v1719 = vmul.f32 %v1718, %v1717
    %v1720 = vrot.slane %v1546, 6
    %v1722 = vmul.f32 %v1710, %v1720
    %v1723 = vadd.f32 %v1719, %v1722
    %v1724 = vld [vmem:[#allocation8] sm:$0xff]
    %v1725 = vld [vmem:[#allocation8 + $0x8] sm:$0xff]
    %v1726 = vld [vmem:[#allocation8 + $0x10] sm:$0xff]
    %v1727 = vld [vmem:[#allocation8 + $0x18] sm:$0xff]
    %v1728 = vld [vmem:[#allocation8 + $0x20] sm:$0xff]
    %v1729 = vld [vmem:[#allocation8 + $0x28] sm:$0xff]
    %v1730 = vld [vmem:[#allocation8 + $0x30] sm:$0xff]
    %v1731 = vld [vmem:[#allocation8 + $0x38] sm:$0xff]
    %v1732 = vld [vmem:[#allocation8 + $0x40] sm:$0xff]
    %v1733 = vld [vmem:[#allocation8 + $0x48] sm:$0xff]
    %v1734 = vld [vmem:[#allocation8 + $0x50] sm:$0xff]
    %v1735 = vld [vmem:[#allocation8 + $0x58] sm:$0xff]
    %v1736 = vld [vmem:[#allocation8 + $0x60] sm:$0xff]
    %v1737 = vld [vmem:[#allocation8 + $0x68] sm:$0xff]
    %v1738 = vld [vmem:[#allocation8 + $0x70] sm:$0xff]
    %v1739 = vld [vmem:[#allocation8 + $0x78] sm:$0xff]
    %v1740 = vld [vmem:[%s6] sm:$0x1]
    %v1742 = vlaneseq
    %v1743 = vshrl.u32 %v1742, 7
    %v1744 = vsub.s32 0, %v1743
    %v1745 = vrot.slane %v1740, %v1744
    %v1748 = vrot.slane %v1723, 6
    %1750 = vmatprep.subr.mxu0 0.0
    %1751 = vmatpush1.msra.mxu0 %v1724
    %1752 = vmatprep.subr.mxu0 0.0
    %1753 = vmatpush1.msra.mxu0 %v1725
    %1754 = vmatprep.subr.mxu0 0.0
    %1755 = vmatpush1.msra.mxu0 %v1726
    %1756 = vmatprep.subr.mxu0 0.0
    %1757 = vmatpush1.msra.mxu0 %v1727
    %1758 = vmatprep.subr.mxu0 0.0
    %1759 = vmatpush1.msra.mxu0 %v1728
    %1760 = vmatprep.subr.mxu0 0.0
    %1761 = vmatpush1.msra.mxu0 %v1729
    %1762 = vmatprep.subr.mxu0 0.0
    %1763 = vmatpush1.msra.mxu0 %v1730
    %1764 = vmatprep.subr.mxu0 0.0
    %1765 = vmatpush1.msra.mxu0 %v1731
    %1766 = vmatprep.subr.mxu0 0.0
    %1767 = vmatpush1.msra.mxu0 %v1732
    %1768 = vmatprep.subr.mxu0 0.0
    %1769 = vmatpush1.msra.mxu0 %v1733
    %1770 = vmatprep.subr.mxu0 0.0
    %1771 = vmatpush1.msra.mxu0 %v1734
    %1772 = vmatprep.subr.mxu0 0.0
    %1773 = vmatpush1.msra.mxu0 %v1735
    %1774 = vmatprep.subr.mxu0 0.0
    %1775 = vmatpush1.msra.mxu0 %v1736
    %1776 = vmatprep.subr.mxu0 0.0
    %1777 = vmatpush1.msra.mxu0 %v1737
    %1778 = vmatprep.subr.mxu0 0.0
    %1779 = vmatpush1.msra.mxu0 %v1738
    %1780 = vmatprep.subr.mxu0 0.0
    %1781 = vmatpush1.msra.mxu0 %v1739
    %1782 = vmatprep.subr.mxu0 0.0
    %1783 = vmatpush1.msra.mxu0 0.0
    %1784 = vmatprep.subr.mxu0 0.0
    %1785 = vmatpush1.msra.mxu0 0.0
    %1786 = vmatprep.subr.mxu0 0.0
    %1787 = vmatpush1.msra.mxu0 0.0
    %1788 = vmatprep.subr.mxu0 0.0
    %1789 = vmatpush1.msra.mxu0 0.0
    %1790 = vmatprep.subr.mxu0 0.0
    %1791 = vmatpush1.msra.mxu0 0.0
    %1792 = vmatprep.subr.mxu0 0.0
    %1793 = vmatpush1.msra.mxu0 0.0
    %1794 = vmatprep.subr.mxu0 0.0
    %1795 = vmatpush1.msra.mxu0 0.0
    %1796 = vmatprep.subr.mxu0 0.0
    %1797 = vmatpush1.msra.mxu0 0.0
    %1798 = vmatprep.subr.mxu0 0.0
    %1799 = vmatpush1.msra.mxu0 0.0
    %1800 = vmatprep.subr.mxu0 0.0
    %1801 = vmatpush1.msra.mxu0 0.0
    %1802 = vmatprep.subr.mxu0 0.0
    %1803 = vmatpush1.msra.mxu0 0.0
    %1804 = vmatprep.subr.mxu0 0.0
    %1805 = vmatpush1.msra.mxu0 0.0
    %1806 = vmatprep.subr.mxu0 0.0
    %1807 = vmatpush1.msra.mxu0 0.0
    %1808 = vmatprep.subr.mxu0 0.0
    %1809 = vmatpush1.msra.mxu0 0.0
    %1810 = vmatprep.subr.mxu0 0.0
    %1811 = vmatpush1.msra.mxu0 0.0
    %1812 = vmatprep.subr.mxu0 0.0
    %1813 = vmatpush1.msra.mxu0 0.0
    %1814 = vmatprep.mubr.f32.mxu0 0.0
    %1815 = vmatmul.mubr.f32.gmra.mrb[0].mxu0 %v1748
    %v1816 = vpop.f32.mrb[0].mxu0
    %v1817 = vadd.f32 %v1745, %v1816
    %v1818 = vpop.f32.mrb[0].mxu0
    %1819 = vdwg.mxu0
    %1820 = vst [vmem:[#allocation10] sm:$0x3] %v1817
    // Predicated region
    $region46: #{tpu_custom_call.1} parent=1 // pred_check
      _
    $region47: #{tpu_custom_call.1} parent=1 // pred_check_branch
      %1822 = sbr.rel (0) target = $region49
    $region48: #{tpu_custom_call.1} parent=1 // pred_region
      %s1824 = ssub.s32 32, 32
      %1825 = vsyncadd [#allocation4], %s1824
      %s1827 = sshll.u32 [#allocation10], 4
      %s1828 = int_to_ptr.vmem [resolvable:$true] %s1827
      %1830 = dma.vmem_to_hbm [thread:$0]  %s1828, 32, %s7, [#allocation4]
    $region49: #{tpu_custom_call.1} parent=1 // pred_fallthru
      _
    // Predicated region
    $region50: #{tpu_custom_call.1} parent=1 // pred_check
      _
    $region51: #{tpu_custom_call.1} parent=1 // pred_check_branch
      %1832 = sbr.rel (0) target = $region53
    $region52: #{tpu_custom_call.1} parent=1 // pred_region
      %1833 = dma.done [#allocation4], 32
    $region53: #{tpu_custom_call.1} parent=1 // pred_fallthru
      _
    %1834 = vsyncpa [#allocation3], 1
    %1835 = vsyncpa [#allocation6], 1
    %1836 = vsyncpa [#allocation9], 1
    %1837 = vsyncpa [#allocation4], 1

</llo_original>
